<compile_context>
chip_gen: v7x
topology: tpu7x:2x2x1
jax: 0.10.0
libtpu: 0.0.40
codegen_flags: <defaults>
</compile_context>

<pallas_src>
import math

import jax
import jax.numpy as jnp
from jax import lax
from jax.experimental import pallas as pl
from jax.experimental.pallas import tpu as pltpu

LN_EPS = 1e-5


def _round_up(x, m):
    return (x + m - 1) // m * m


def _normalize(x):
    # PyTorch nn.LayerNorm statistics: biased variance, eps=1e-5 (no affine).
    mean = jnp.mean(x, axis=-1, keepdims=True)
    var = jnp.mean((x - mean) ** 2, axis=-1, keepdims=True)
    return (x - mean) * lax.rsqrt(var + LN_EPS)


def _layernorm(x, gamma, beta):
    return _normalize(x) * gamma + beta


# ---------------------------------------------------------------------------
# Batched few-shot regression kernel, gridded over the batch dimension.
# ---------------------------------------------------------------------------
def _fewshot_kernel(scal_ref,                             # SMEM (2,): scale, res_scale
                    q_ref, refv_ref,                      # (TB, D), (TB, K)
                    w_ref, b_ref,                         # (D, H) folded W', (1, H) folded bias
                    rT_ref, c_ref,                        # (H, K) folded refs, (1, K) score bias
                    out_ref):                             # (TB, 1)
    scale = scal_ref[0]
    res_scale = scal_ref[1]

    # query projection: pure-normalize -> matmul(+folded bias) -> pure-normalize
    n1 = _normalize(q_ref[...].astype(jnp.float32))                  # (TB, D) f32
    z = jnp.dot(n1.astype(w_ref.dtype), w_ref[...],
                preferred_element_type=jnp.float32) + b_ref[...]     # (TB, H) f32
    n2 = _normalize(z)                                               # (TB, H) f32

    # scaled scores: native NN matmul against the pre-transposed (H, K) refs
    # (LN2 affine and 1/(tau*sqrt(H)) are folded into rT_ref / c_ref).
    s = jnp.dot(n2, rT_ref[...], preferred_element_type=jnp.float32) + c_ref[...]

    # softmax over refs fused with the weighted sum; one exact divide per row
    # (review: avoid approx reciprocal, errors amplify through the logit).
    e = jnp.exp(s - jnp.max(s, axis=-1, keepdims=True))              # (TB, K)
    num = jnp.sum(e * refv_ref[...], axis=-1, keepdims=True)
    den = jnp.sum(e, axis=-1, keepdims=True)
    base = jnp.clip(num / den, 1e-4, 1.0 - 1e-4)

    # platt scaling: sigmoid(scale * logit(base) + res_scale)
    logit = jnp.log(base) - jnp.log(1.0 - base)
    out_ref[...] = jax.nn.sigmoid(scale * logit + res_scale)


# ---------------------------------------------------------------------------
# Tiling / VMEM-budget helpers.
# ---------------------------------------------------------------------------
def _tile_bytes(shape, dtype, buffers=1):
    """Approx VMEM bytes of one (buffered) tile, padded to layout granules."""
    itemsize = jnp.dtype(dtype).itemsize
    rows = _round_up(shape[-2] if len(shape) > 1 else 1, 32 // itemsize)
    cols = _round_up(shape[-1], 128)
    return buffers * rows * cols * itemsize


def _choose_tb(B, tb_req, sub):
    """Batch tile: >=2 grid steps when possible (v7x megacore), >=`sub` rows
    (bf16 sublane packing), MXU-friendly 256/128 alignment when large."""
    half = _round_up(max(-(-B // 2), sub), sub)
    t = _round_up(max(min(tb_req, half), sub), sub)
    if t >= 256:
        t = t // 256 * 256
    elif t >= 128:
        t = t // 128 * 128
    return t


# ---------------------------------------------------------------------------
# Wrapper.
# ---------------------------------------------------------------------------
def fewshot_regressor(q, r, ref_values, params, tau=1.0, *,
                      matmul_dtype=jnp.bfloat16, tb=512,
                      vmem_limit_bytes=None, vmem_target_bytes=40 << 20):
    """q: (B, D) query embeddings, r: (K, D) reference embeddings,
    ref_values: (B, K) reference labels in [0, 1].  Returns (B,) float32."""
    B, D = q.shape
    K = ref_values.shape[1]
    H = params["q_w"].shape[1]
    f32 = jnp.float32

    # ---- one-time, batch-independent precompute (plain f32 XLA) ------------
    # Reference projection LN(D) -> Linear(D,H) -> LN(H) on the K rows (the
    # torch code expands r to (B, K, D), but the projection is batch
    # independent, so a single (K, D) projection is numerically identical).
    rp = _layernorm(r.astype(f32), params["r_ln1_g"], params["r_ln1_b"])
    rp = rp @ params["r_w"].astype(f32) + params["r_bias"]
    rp = _layernorm(rp, params["r_ln2_g"], params["r_ln2_b"])           # (K, H)

    inv = (1.0 / math.sqrt(H)) / jnp.asarray(tau, f32)                  # 1/(tau*sqrt(H))
    # Fold query LN1 affine into the Linear weight / bias.
    w_fold = (params["q_w"].astype(f32)
              * params["q_ln1_g"][:, None]).astype(matmul_dtype)        # (D, H)
    b_fold = (params["q_ln1_b"] @ params["q_w"].astype(f32)
              + params["q_bias"]).reshape(1, H).astype(f32)             # (1, H)
    # Fold query LN2 affine and 1/(tau*sqrt(H)) into the (pre-transposed, f32)
    # reference projection and a per-reference additive score bias.
    r_fold = ((rp * params["q_ln2_g"][None, :]).T * inv).astype(f32)    # (H, K)
    c_fold = ((rp @ params["q_ln2_b"]) * inv).reshape(1, K).astype(f32)  # (1, K)

    # Platt scalars built on-device (no host sync).
    scal = jnp.stack([params["scale"].astype(f32)[0],
                      params["res_scale"].astype(f32)[0]])

    # ---- batch tiling + VMEM budget -----------------------------------------
    sub = 16 if jnp.dtype(matmul_dtype).itemsize < 4 else 8
    TB = _choose_tb(B, tb, sub)

    resident_bytes = (_tile_bytes((D, H), matmul_dtype, 1)
                      + _tile_bytes((1, H), f32, 1)
                      + _tile_bytes((H, K), f32, 1)
                      + _tile_bytes((1, K), f32, 1))

    def budget(tb_):
        return (resident_bytes
                + _tile_bytes((tb_, D), matmul_dtype, 2)   # double-buffered q
                + _tile_bytes((tb_, K), f32, 2)            # double-buffered ref_values
                + _tile_bytes((tb_, 1), f32, 2))           # double-buffered out

    while TB > sub and budget(TB) > vmem_target_bytes:      # keep v7x (64 MiB) happy
        TB = max(_round_up(TB // 2, sub), sub)

    if vmem_limit_bytes is None:
        vmem_limit_bytes = int(max(32 << 20, 2 * budget(TB) + (4 << 20)))

    Bp = _round_up(B, TB)
    qp = q.astype(matmul_dtype)
    rv = ref_values.astype(f32)
    if Bp != B:
        # zero rows stay finite through normalize/softmax/logit; sliced off below
        qp = jnp.pad(qp, ((0, Bp - B), (0, 0)))
        rv = jnp.pad(rv, ((0, Bp - B), (0, 0)))

    bq = jnp.dtype(matmul_dtype).itemsize
    cost = pl.CostEstimate(
        flops=2 * Bp * H * (D + K) + 8 * Bp * (D + H + K),
        transcendentals=Bp * (K + 8),
        bytes_accessed=bq * (Bp * D + D * H)
        + 4 * (Bp * (K + 1) + H * (K + 1) + K + 2),
    )

    def run(single_buffer_resident):
        if single_buffer_resident:
            def resident(shape):  # grid-constant block, single VMEM buffer
                return pl.BlockSpec(shape, lambda i: (0, 0),
                                    pipeline_mode=pl.Buffered(1))
        else:
            def resident(shape):
                return pl.BlockSpec(shape, lambda i: (0, 0))

        return pl.pallas_call(
            _fewshot_kernel,
            out_shape=jax.ShapeDtypeStruct((Bp, 1), f32),
            grid=(Bp // TB,),
            in_specs=[
                pl.BlockSpec(memory_space=pltpu.MemorySpace.SMEM),  # platt scalars
                pl.BlockSpec((TB, D), lambda i: (i, 0)),            # q tile
                pl.BlockSpec((TB, K), lambda i: (i, 0)),            # ref_values tile
                resident((D, H)),                                   # folded weight
                resident((1, H)),                                   # folded bias
                resident((H, K)),                                   # folded r_proj^T
                resident((1, K)),                                   # folded score bias
            ],
            # TODO(synk): for very small D/H the (TB,1) output stores are masked
            # vst; a lane-major (grid, TB) output layout would remove them
            # (review: low priority, skipped).
            out_specs=pl.BlockSpec((TB, 1), lambda i: (i, 0)),
            compiler_params=pltpu.CompilerParams(
                dimension_semantics=("parallel",),                  # megacore on v7x
                vmem_limit_bytes=vmem_limit_bytes),
            cost_estimate=cost,
        )(scal, qp, rv, w_fold, b_fold, r_fold, c_fold)

    try:
        out = run(True)
    except Exception:
        # Fallback if this JAX build rejects pipeline_mode=pl.Buffered(1);
        # identical semantics, just default double-buffering of residents.
        out = run(False)
    return out[:B, 0]  # (B,)


# ---------------------------------------------------------------------------
# Pure-JAX reference (f32, exact) for a silent correctness check.
# ---------------------------------------------------------------------------
def _reference(q, r, ref_values, params, tau=1.0):
    def proj(x, g1, b1, w, b, g2, b2):
        x = _layernorm(x, g1.reshape(1, -1), b1.reshape(1, -1))
        x = x @ w + b.reshape(1, -1)
        return _layernorm(x, g2.reshape(1, -1), b2.reshape(1, -1))

    qp = proj(q, params["q_ln1_g"], params["q_ln1_b"], params["q_w"],
              params["q_bias"], params["q_ln2_g"], params["q_ln2_b"])
    rp = proj(r, params["r_ln1_g"], params["r_ln1_b"], params["r_w"],
              params["r_bias"], params["r_ln2_g"], params["r_ln2_b"])
    H = rp.shape[-1]
    scores = (qp @ rp.T) / math.sqrt(H)
    w = scores / tau
    w = w - jnp.max(w, axis=-1, keepdims=True)
    w = jax.nn.softmax(w, axis=-1)
    base = jnp.sum(w * ref_values, axis=-1)
    base = jnp.clip(base, 1e-4, 1.0 - 1e-4)
    logit = jnp.log(base) - jnp.log(1.0 - base)
    return jax.nn.sigmoid(params["scale"][0] * logit + params["res_scale"][0])


def init_params(key, D, H):
    k1, k2, k3, k4 = jax.random.split(key, 4)
    s = 0.02
    return {
        # query projection
        "q_ln1_g": jnp.ones((D,), jnp.float32),
        "q_ln1_b": jnp.zeros((D,), jnp.float32),
        "q_w": s * jax.random.normal(k1, (D, H), jnp.float32),  # (in, out) = W^T
        "q_bias": s * jax.random.normal(k2, (H,), jnp.float32),
        "q_ln2_g": jnp.ones((H,), jnp.float32),
        "q_ln2_b": jnp.zeros((H,), jnp.float32),
        # ref projection
        "r_ln1_g": jnp.ones((D,), jnp.float32),
        "r_ln1_b": jnp.zeros((D,), jnp.float32),
        "r_w": s * jax.random.normal(k3, (D, H), jnp.float32),
        "r_bias": s * jax.random.normal(k4, (H,), jnp.float32),
        "r_ln2_g": jnp.ones((H,), jnp.float32),
        "r_ln2_b": jnp.zeros((H,), jnp.float32),
        # platt scaling params (nn.Parameter(torch.ones(1)))
        "scale": jnp.ones((1,), jnp.float32),
        "res_scale": jnp.ones((1,), jnp.float32),
    }


if __name__ == "__main__":
    # small shapes; B=20 gives a 2-step batch grid by default (megacore path)
    B, K, D, H = 20, 8, 32, 32
    key = jax.random.PRNGKey(0)
    kq, kr, kv, kp = jax.random.split(key, 4)

    q = jax.random.normal(kq, (B, D), jnp.float32)            # query embeddings
    r = jax.random.normal(kr, (K, D), jnp.float32)            # reference embeddings
    ref_values = jax.random.uniform(kv, (B, K), jnp.float32)  # reference labels in [0,1]
    params = init_params(kp, D, H)
    tau = 0.7

    ref = _reference(q, r, ref_values, params, tau)

    # Default path: bf16 matmul operands (q tile + folded weight), f32 LN
    # statistics / accumulation / r_proj / epilogue.
    out = jax.block_until_ready(fewshot_regressor(q, r, ref_values, params, tau))
    assert out.shape == (B,)
    assert bool(jnp.allclose(out, ref, atol=5e-2, rtol=5e-2))

    # f32 operand path (tight check; tb=8 exercises a 3-step batch grid + padding).
    out_f32 = jax.block_until_ready(
        fewshot_regressor(q, r, ref_values, params, tau,
                          matmul_dtype=jnp.float32, tb=8))
    assert bool(jnp.allclose(out_f32, ref, atol=2e-3, rtol=2e-3))

    print("KERNEL_OK")
</pallas_src>

<mosaic_0001>
module attributes {stable_mosaic.version = 11 : i64} {
  func.func @_fewshot_kernel(%arg0: i32, %arg1: memref<2xf32, #tpu.memory_space<smem>>, %arg2: memref<16x32xbf16, #tpu.memory_space<vmem>>, %arg3: memref<16x8xf32, #tpu.memory_space<vmem>>, %arg4: memref<32x32xbf16, #tpu.memory_space<vmem>>, %arg5: memref<1x32xf32, #tpu.memory_space<vmem>>, %arg6: memref<32x8xf32, #tpu.memory_space<vmem>>, %arg7: memref<1x8xf32, #tpu.memory_space<vmem>>, %arg8: memref<16x1xf32, #tpu.memory_space<vmem>>) attributes {dimension_semantics = [#tpu.dimension_semantics<parallel>], iteration_bounds = array<i64: 2>, scalar_prefetch = 0 : i64, scratch_operands = 0 : i64, tpu.core_type = #tpu.core_type<tc>, window_params = [{transform_indices = @transform_0, window_bounds = array<i64: 2>}, {transform_indices = @transform_1, window_bounds = array<i64: 16, 32>}, {transform_indices = @transform_2, window_bounds = array<i64: 16, 8>}, {pipeline_mode = #tpu.pipeline_mode<synchronous>, transform_indices = @transform_3, window_bounds = array<i64: 32, 32>}, {pipeline_mode = #tpu.pipeline_mode<synchronous>, transform_indices = @transform_4, window_bounds = array<i64: 1, 32>}, {pipeline_mode = #tpu.pipeline_mode<synchronous>, transform_indices = @transform_5, window_bounds = array<i64: 32, 8>}, {pipeline_mode = #tpu.pipeline_mode<synchronous>, transform_indices = @transform_6, window_bounds = array<i64: 1, 8>}, {transform_indices = @transform_7, window_bounds = array<i64: 16, 1>}]} {
    %c0 = arith.constant 0 : index
    %0 = memref.load %arg1[%c0] : memref<2xf32, #tpu.memory_space<smem>>
    %c1 = arith.constant 1 : index
    %1 = memref.load %arg1[%c1] : memref<2xf32, #tpu.memory_space<smem>>
    %c0_0 = arith.constant 0 : index
    %c0_1 = arith.constant 0 : index
    %2 = vector.load %arg2[%c0_0, %c0_1] : memref<16x32xbf16, #tpu.memory_space<vmem>>, vector<16x32xbf16>
    %3 = arith.extf %2 : vector<16x32xbf16> to vector<16x32xf32>
    %cst = arith.constant dense<0.000000e+00> : vector<16xf32>
    %4 = vector.multi_reduction <add>, %3, %cst [1] : vector<16x32xf32> to vector<16xf32>
    %5 = vector.shape_cast %4 : vector<16xf32> to vector<16x1xf32>
    %cst_2 = arith.constant 3.200000e+01 : f32
    %6 = vector.broadcast %cst_2 : f32 to vector<16x1xf32>
    %7 = arith.divf %5, %6 : vector<16x1xf32>
    %8 = vector.broadcast %7 : vector<16x1xf32> to vector<16x32xf32>
    %9 = arith.subf %3, %8 : vector<16x32xf32>
    %10 = arith.mulf %9, %9 : vector<16x32xf32>
    %cst_3 = arith.constant dense<0.000000e+00> : vector<16xf32>
    %11 = vector.multi_reduction <add>, %10, %cst_3 [1] : vector<16x32xf32> to vector<16xf32>
    %12 = vector.shape_cast %11 : vector<16xf32> to vector<16x1xf32>
    %cst_4 = arith.constant 3.200000e+01 : f32
    %13 = vector.broadcast %cst_4 : f32 to vector<16x1xf32>
    %14 = arith.divf %12, %13 : vector<16x1xf32>
    %15 = vector.broadcast %7 : vector<16x1xf32> to vector<16x32xf32>
    %16 = arith.subf %3, %15 : vector<16x32xf32>
    %cst_5 = arith.constant 9.99999974E-6 : f32
    %17 = vector.broadcast %cst_5 : f32 to vector<16x1xf32>
    %18 = arith.addf %14, %17 : vector<16x1xf32>
    %19 = math.rsqrt %18 : vector<16x1xf32>
    %20 = vector.broadcast %19 : vector<16x1xf32> to vector<16x32xf32>
    %21 = arith.mulf %16, %20 : vector<16x32xf32>
    %22 = arith.truncf %21 : vector<16x32xf32> to vector<16x32xbf16>
    %c0_6 = arith.constant 0 : index
    %c0_7 = arith.constant 0 : index
    %23 = vector.load %arg4[%c0_6, %c0_7] : memref<32x32xbf16, #tpu.memory_space<vmem>>, vector<32x32xbf16>
    %cst_8 = arith.constant dense<0.000000e+00> : vector<16x32xf32>
    %24 = tpu.matmul %22, %23, %cst_8 {dimension_numbers = #tpu.dot_dimension_numbers<[1], [0], [0], [1], [0, 0, 1, 1], [], []>} : vector<16x32xbf16>, vector<32x32xbf16>, vector<16x32xf32> -> vector<16x32xf32>
    %c0_9 = arith.constant 0 : index
    %c0_10 = arith.constant 0 : index
    %25 = vector.load %arg5[%c0_9, %c0_10] : memref<1x32xf32, #tpu.memory_space<vmem>>, vector<1x32xf32>
    %26 = vector.broadcast %25 : vector<1x32xf32> to vector<16x32xf32>
    %27 = arith.addf %24, %26 : vector<16x32xf32>
    %cst_11 = arith.constant dense<0.000000e+00> : vector<16xf32>
    %28 = vector.multi_reduction <add>, %27, %cst_11 [1] : vector<16x32xf32> to vector<16xf32>
    %29 = vector.shape_cast %28 : vector<16xf32> to vector<16x1xf32>
    %cst_12 = arith.constant 3.200000e+01 : f32
    %30 = vector.broadcast %cst_12 : f32 to vector<16x1xf32>
    %31 = arith.divf %29, %30 : vector<16x1xf32>
    %32 = vector.broadcast %31 : vector<16x1xf32> to vector<16x32xf32>
    %33 = arith.subf %27, %32 : vector<16x32xf32>
    %34 = arith.mulf %33, %33 : vector<16x32xf32>
    %cst_13 = arith.constant dense<0.000000e+00> : vector<16xf32>
    %35 = vector.multi_reduction <add>, %34, %cst_13 [1] : vector<16x32xf32> to vector<16xf32>
    %36 = vector.shape_cast %35 : vector<16xf32> to vector<16x1xf32>
    %cst_14 = arith.constant 3.200000e+01 : f32
    %37 = vector.broadcast %cst_14 : f32 to vector<16x1xf32>
    %38 = arith.divf %36, %37 : vector<16x1xf32>
    %39 = vector.broadcast %31 : vector<16x1xf32> to vector<16x32xf32>
    %40 = arith.subf %27, %39 : vector<16x32xf32>
    %cst_15 = arith.constant 9.99999974E-6 : f32
    %41 = vector.broadcast %cst_15 : f32 to vector<16x1xf32>
    %42 = arith.addf %38, %41 : vector<16x1xf32>
    %43 = math.rsqrt %42 : vector<16x1xf32>
    %44 = vector.broadcast %43 : vector<16x1xf32> to vector<16x32xf32>
    %45 = arith.mulf %40, %44 : vector<16x32xf32>
    %c0_16 = arith.constant 0 : index
    %c0_17 = arith.constant 0 : index
    %46 = vector.load %arg6[%c0_16, %c0_17] : memref<32x8xf32, #tpu.memory_space<vmem>>, vector<32x8xf32>
    %cst_18 = arith.constant dense<0.000000e+00> : vector<16x8xf32>
    %47 = tpu.matmul %45, %46, %cst_18 {dimension_numbers = #tpu.dot_dimension_numbers<[1], [0], [0], [1], [0, 0, 1, 1], [], []>} : vector<16x32xf32>, vector<32x8xf32>, vector<16x8xf32> -> vector<16x8xf32>
    %c0_19 = arith.constant 0 : index
    %c0_20 = arith.constant 0 : index
    %48 = vector.load %arg7[%c0_19, %c0_20] : memref<1x8xf32, #tpu.memory_space<vmem>>, vector<1x8xf32>
    %49 = vector.broadcast %48 : vector<1x8xf32> to vector<16x8xf32>
    %50 = arith.addf %47, %49 : vector<16x8xf32>
    %cst_21 = arith.constant dense<0xFF800000> : vector<16xf32>
    %51 = vector.multi_reduction <maximumf>, %50, %cst_21 [1] : vector<16x8xf32> to vector<16xf32>
    %52 = vector.shape_cast %51 : vector<16xf32> to vector<16x1xf32>
    %53 = vector.broadcast %52 : vector<16x1xf32> to vector<16x8xf32>
    %54 = arith.subf %50, %53 : vector<16x8xf32>
    %55 = math.exp %54 : vector<16x8xf32>
    %c0_22 = arith.constant 0 : index
    %c0_23 = arith.constant 0 : index
    %56 = vector.load %arg3[%c0_22, %c0_23] : memref<16x8xf32, #tpu.memory_space<vmem>>, vector<16x8xf32>
    %57 = arith.mulf %55, %56 : vector<16x8xf32>
    %cst_24 = arith.constant dense<0.000000e+00> : vector<16xf32>
    %58 = vector.multi_reduction <add>, %57, %cst_24 [1] : vector<16x8xf32> to vector<16xf32>
    %59 = vector.shape_cast %58 : vector<16xf32> to vector<16x1xf32>
    %cst_25 = arith.constant dense<0.000000e+00> : vector<16xf32>
    %60 = vector.multi_reduction <add>, %55, %cst_25 [1] : vector<16x8xf32> to vector<16xf32>
    %61 = vector.shape_cast %60 : vector<16xf32> to vector<16x1xf32>
    %62 = arith.divf %59, %61 : vector<16x1xf32>
    %cst_26 = arith.constant 9.99999974E-5 : f32
    %cst_27 = arith.constant 0.999899983 : f32
    %63 = vector.broadcast %cst_26 : f32 to vector<16x1xf32>
    %64 = arith.maximumf %63, %62 : vector<16x1xf32>
    %65 = vector.broadcast %cst_27 : f32 to vector<16x1xf32>
    %66 = arith.minimumf %65, %64 : vector<16x1xf32>
    %67 = math.log %66 : vector<16x1xf32>
    %cst_28 = arith.constant 1.000000e+00 : f32
    %68 = vector.broadcast %cst_28 : f32 to vector<16x1xf32>
    %69 = arith.subf %68, %66 : vector<16x1xf32>
    %70 = math.log %69 : vector<16x1xf32>
    %71 = arith.subf %67, %70 : vector<16x1xf32>
    %72 = vector.broadcast %0 : f32 to vector<16x1xf32>
    %73 = arith.mulf %72, %71 : vector<16x1xf32>
    %74 = vector.broadcast %1 : f32 to vector<16x1xf32>
    %75 = arith.addf %73, %74 : vector<16x1xf32>
    %76 = arith.negf %75 : vector<16x1xf32>
    %77 = math.exp %76 : vector<16x1xf32>
    %cst_29 = arith.constant 1.000000e+00 : f32
    %78 = vector.broadcast %cst_29 : f32 to vector<16x1xf32>
    %79 = arith.addf %78, %77 : vector<16x1xf32>
    %80 = arith.divf %78, %79 : vector<16x1xf32>
    %c0_30 = arith.constant 0 : index
    %c0_31 = arith.constant 0 : index
    %81 = vector.load %arg8[%c0_30, %c0_31] : memref<16x1xf32, #tpu.memory_space<vmem>>, vector<16x1xf32>
    tpu.vector_store %arg8[%c0_30, %c0_31], %80 {strides = array<i32>} : memref<16x1xf32, #tpu.memory_space<vmem>>, vector<16x1xf32>,
    return
  }
  func.func @transform_0(%arg0: i32) -> i32 {
    %c0_i32 = arith.constant 0 : i32
    %c0_i32_0 = arith.constant 0 : i32
    return %c0_i32 : i32
  }
  func.func @transform_1(%arg0: i32) -> (i32, i32) {
    %c0_i32 = arith.constant 0 : i32
    %c0_i32_0 = arith.constant 0 : i32
    return %arg0, %c0_i32 : i32, i32
  }
  func.func @transform_2(%arg0: i32) -> (i32, i32) {
    %c0_i32 = arith.constant 0 : i32
    %c0_i32_0 = arith.constant 0 : i32
    return %arg0, %c0_i32 : i32, i32
  }
  func.func @transform_3(%arg0: i32) -> (i32, i32) {
    %c0_i32 = arith.constant 0 : i32
    %c0_i32_0 = arith.constant 0 : i32
    %c0_i32_1 = arith.constant 0 : i32
    return %c0_i32, %c0_i32_0 : i32, i32
  }
  func.func @transform_4(%arg0: i32) -> (i32, i32) {
    %c0_i32 = arith.constant 0 : i32
    %c0_i32_0 = arith.constant 0 : i32
    %c0_i32_1 = arith.constant 0 : i32
    return %c0_i32, %c0_i32_0 : i32, i32
  }
  func.func @transform_5(%arg0: i32) -> (i32, i32) {
    %c0_i32 = arith.constant 0 : i32
    %c0_i32_0 = arith.constant 0 : i32
    %c0_i32_1 = arith.constant 0 : i32
    return %c0_i32, %c0_i32_0 : i32, i32
  }
  func.func @transform_6(%arg0: i32) -> (i32, i32) {
    %c0_i32 = arith.constant 0 : i32
    %c0_i32_0 = arith.constant 0 : i32
    %c0_i32_1 = arith.constant 0 : i32
    return %c0_i32, %c0_i32_0 : i32, i32
  }
  func.func @transform_7(%arg0: i32) -> (i32, i32) {
    %c0_i32 = arith.constant 0 : i32
    %c0_i32_0 = arith.constant 0 : i32
    return %arg0, %c0_i32 : i32, i32
  }
}

module attributes {stable_mosaic.version = 11 : i64} {
  func.func @_fewshot_kernel(%arg0: i32, %arg1: memref<2xf32, #tpu.memory_space<smem>>, %arg2: memref<16x32xbf16, #tpu.memory_space<vmem>>, %arg3: memref<16x8xf32, #tpu.memory_space<vmem>>, %arg4: memref<32x32xbf16, #tpu.memory_space<vmem>>, %arg5: memref<1x32xf32, #tpu.memory_space<vmem>>, %arg6: memref<32x8xf32, #tpu.memory_space<vmem>>, %arg7: memref<1x8xf32, #tpu.memory_space<vmem>>, %arg8: memref<16x1xf32, #tpu.memory_space<vmem>>) attributes {dimension_semantics = [#tpu.dimension_semantics<parallel>], iteration_bounds = array<i64: 2>, scalar_prefetch = 0 : i64, scratch_operands = 0 : i64, tpu.core_type = #tpu.core_type<tc>, window_params = [{transform_indices = @transform_0, window_bounds = array<i64: 2>}, {transform_indices = @transform_1, window_bounds = array<i64: 16, 32>}, {transform_indices = @transform_2, window_bounds = array<i64: 16, 8>}, {pipeline_mode = #tpu.pipeline_mode<synchronous>, transform_indices = @transform_3, window_bounds = array<i64: 32, 32>}, {pipeline_mode = #tpu.pipeline_mode<synchronous>, transform_indices = @transform_4, window_bounds = array<i64: 1, 32>}, {pipeline_mode = #tpu.pipeline_mode<synchronous>, transform_indices = @transform_5, window_bounds = array<i64: 32, 8>}, {pipeline_mode = #tpu.pipeline_mode<synchronous>, transform_indices = @transform_6, window_bounds = array<i64: 1, 8>}, {transform_indices = @transform_7, window_bounds = array<i64: 16, 1>}]} {
    %c0 = arith.constant 0 : index
    %0 = memref.load %arg1[%c0] : memref<2xf32, #tpu.memory_space<smem>>
    %c1 = arith.constant 1 : index
    %1 = memref.load %arg1[%c1] : memref<2xf32, #tpu.memory_space<smem>>
    %c0_0 = arith.constant 0 : index
    %c0_1 = arith.constant 0 : index
    %2 = vector.load %arg2[%c0_0, %c0_1] : memref<16x32xbf16, #tpu.memory_space<vmem>>, vector<16x32xbf16>
    %3 = arith.extf %2 : vector<16x32xbf16> to vector<16x32xf32>
    %cst = arith.constant dense<0.000000e+00> : vector<16xf32>
    %4 = vector.multi_reduction <add>, %3, %cst [1] : vector<16x32xf32> to vector<16xf32>
    %5 = vector.shape_cast %4 : vector<16xf32> to vector<16x1xf32>
    %cst_2 = arith.constant 3.200000e+01 : f32
    %6 = vector.broadcast %cst_2 : f32 to vector<16x1xf32>
    %7 = arith.divf %5, %6 : vector<16x1xf32>
    %8 = vector.broadcast %7 : vector<16x1xf32> to vector<16x32xf32>
    %9 = arith.subf %3, %8 : vector<16x32xf32>
    %10 = arith.mulf %9, %9 : vector<16x32xf32>
    %cst_3 = arith.constant dense<0.000000e+00> : vector<16xf32>
    %11 = vector.multi_reduction <add>, %10, %cst_3 [1] : vector<16x32xf32> to vector<16xf32>
    %12 = vector.shape_cast %11 : vector<16xf32> to vector<16x1xf32>
    %cst_4 = arith.constant 3.200000e+01 : f32
    %13 = vector.broadcast %cst_4 : f32 to vector<16x1xf32>
    %14 = arith.divf %12, %13 : vector<16x1xf32>
    %15 = vector.broadcast %7 : vector<16x1xf32> to vector<16x32xf32>
    %16 = arith.subf %3, %15 : vector<16x32xf32>
    %cst_5 = arith.constant 9.99999974E-6 : f32
    %17 = vector.broadcast %cst_5 : f32 to vector<16x1xf32>
    %18 = arith.addf %14, %17 : vector<16x1xf32>
    %19 = math.rsqrt %18 : vector<16x1xf32>
    %20 = vector.broadcast %19 : vector<16x1xf32> to vector<16x32xf32>
    %21 = arith.mulf %16, %20 : vector<16x32xf32>
    %22 = arith.truncf %21 : vector<16x32xf32> to vector<16x32xbf16>
    %c0_6 = arith.constant 0 : index
    %c0_7 = arith.constant 0 : index
    %23 = vector.load %arg4[%c0_6, %c0_7] : memref<32x32xbf16, #tpu.memory_space<vmem>>, vector<32x32xbf16>
    %cst_8 = arith.constant dense<0.000000e+00> : vector<16x32xf32>
    %24 = tpu.matmul %22, %23, %cst_8 {dimension_numbers = #tpu.dot_dimension_numbers<[1], [0], [0], [1], [0, 0, 1, 1], [], []>} : vector<16x32xbf16>, vector<32x32xbf16>, vector<16x32xf32> -> vector<16x32xf32>
    %c0_9 = arith.constant 0 : index
    %c0_10 = arith.constant 0 : index
    %25 = vector.load %arg5[%c0_9, %c0_10] : memref<1x32xf32, #tpu.memory_space<vmem>>, vector<1x32xf32>
    %26 = vector.broadcast %25 : vector<1x32xf32> to vector<16x32xf32>
    %27 = arith.addf %24, %26 : vector<16x32xf32>
    %cst_11 = arith.constant dense<0.000000e+00> : vector<16xf32>
    %28 = vector.multi_reduction <add>, %27, %cst_11 [1] : vector<16x32xf32> to vector<16xf32>
    %29 = vector.shape_cast %28 : vector<16xf32> to vector<16x1xf32>
    %cst_12 = arith.constant 3.200000e+01 : f32
    %30 = vector.broadcast %cst_12 : f32 to vector<16x1xf32>
    %31 = arith.divf %29, %30 : vector<16x1xf32>
    %32 = vector.broadcast %31 : vector<16x1xf32> to vector<16x32xf32>
    %33 = arith.subf %27, %32 : vector<16x32xf32>
    %34 = arith.mulf %33, %33 : vector<16x32xf32>
    %cst_13 = arith.constant dense<0.000000e+00> : vector<16xf32>
    %35 = vector.multi_reduction <add>, %34, %cst_13 [1] : vector<16x32xf32> to vector<16xf32>
    %36 = vector.shape_cast %35 : vector<16xf32> to vector<16x1xf32>
    %cst_14 = arith.constant 3.200000e+01 : f32
    %37 = vector.broadcast %cst_14 : f32 to vector<16x1xf32>
    %38 = arith.divf %36, %37 : vector<16x1xf32>
    %39 = vector.broadcast %31 : vector<16x1xf32> to vector<16x32xf32>
    %40 = arith.subf %27, %39 : vector<16x32xf32>
    %cst_15 = arith.constant 9.99999974E-6 : f32
    %41 = vector.broadcast %cst_15 : f32 to vector<16x1xf32>
    %42 = arith.addf %38, %41 : vector<16x1xf32>
    %43 = math.rsqrt %42 : vector<16x1xf32>
    %44 = vector.broadcast %43 : vector<16x1xf32> to vector<16x32xf32>
    %45 = arith.mulf %40, %44 : vector<16x32xf32>
    %c0_16 = arith.constant 0 : index
    %c0_17 = arith.constant 0 : index
    %46 = vector.load %arg6[%c0_16, %c0_17] : memref<32x8xf32, #tpu.memory_space<vmem>>, vector<32x8xf32>
    %cst_18 = arith.constant dense<0.000000e+00> : vector<16x8xf32>
    %47 = tpu.matmul %45, %46, %cst_18 {dimension_numbers = #tpu.dot_dimension_numbers<[1], [0], [0], [1], [0, 0, 1, 1], [], []>} : vector<16x32xf32>, vector<32x8xf32>, vector<16x8xf32> -> vector<16x8xf32>
    %c0_19 = arith.constant 0 : index
    %c0_20 = arith.constant 0 : index
    %48 = vector.load %arg7[%c0_19, %c0_20] : memref<1x8xf32, #tpu.memory_space<vmem>>, vector<1x8xf32>
    %49 = vector.broadcast %48 : vector<1x8xf32> to vector<16x8xf32>
    %50 = arith.addf %47, %49 : vector<16x8xf32>
    %cst_21 = arith.constant dense<0xFF800000> : vector<16xf32>
    %51 = vector.multi_reduction <maximumf>, %50, %cst_21 [1] : vector<16x8xf32> to vector<16xf32>
    %52 = vector.shape_cast %51 : vector<16xf32> to vector<16x1xf32>
    %53 = vector.broadcast %52 : vector<16x1xf32> to vector<16x8xf32>
    %54 = arith.subf %50, %53 : vector<16x8xf32>
    %55 = math.exp %54 : vector<16x8xf32>
    %c0_22 = arith.constant 0 : index
    %c0_23 = arith.constant 0 : index
    %56 = vector.load %arg3[%c0_22, %c0_23] : memref<16x8xf32, #tpu.memory_space<vmem>>, vector<16x8xf32>
    %57 = arith.mulf %55, %56 : vector<16x8xf32>
    %cst_24 = arith.constant dense<0.000000e+00> : vector<16xf32>
    %58 = vector.multi_reduction <add>, %57, %cst_24 [1] : vector<16x8xf32> to vector<16xf32>
    %59 = vector.shape_cast %58 : vector<16xf32> to vector<16x1xf32>
    %cst_25 = arith.constant dense<0.000000e+00> : vector<16xf32>
    %60 = vector.multi_reduction <add>, %55, %cst_25 [1] : vector<16x8xf32> to vector<16xf32>
    %61 = vector.shape_cast %60 : vector<16xf32> to vector<16x1xf32>
    %62 = arith.divf %59, %61 : vector<16x1xf32>
    %cst_26 = arith.constant 9.99999974E-5 : f32
    %cst_27 = arith.constant 0.999899983 : f32
    %63 = vector.broadcast %cst_26 : f32 to vector<16x1xf32>
    %64 = arith.maximumf %63, %62 : vector<16x1xf32>
    %65 = vector.broadcast %cst_27 : f32 to vector<16x1xf32>
    %66 = arith.minimumf %65, %64 : vector<16x1xf32>
    %67 = math.log %66 : vector<16x1xf32>
    %cst_28 = arith.constant 1.000000e+00 : f32
    %68 = vector.broadcast %cst_28 : f32 to vector<16x1xf32>
    %69 = arith.subf %68, %66 : vector<16x1xf32>
    %70 = math.log %69 : vector<16x1xf32>
    %71 = arith.subf %67, %70 : vector<16x1xf32>
    %72 = vector.broadcast %0 : f32 to vector<16x1xf32>
    %73 = arith.mulf %72, %71 : vector<16x1xf32>
    %74 = vector.broadcast %1 : f32 to vector<16x1xf32>
    %75 = arith.addf %73, %74 : vector<16x1xf32>
    %76 = arith.negf %75 : vector<16x1xf32>
    %77 = math.exp %76 : vector<16x1xf32>
    %cst_29 = arith.constant 1.000000e+00 : f32
    %78 = vector.broadcast %cst_29 : f32 to vector<16x1xf32>
    %79 = arith.addf %78, %77 : vector<16x1xf32>
    %80 = arith.divf %78, %79 : vector<16x1xf32>
    %c0_30 = arith.constant 0 : index
    %c0_31 = arith.constant 0 : index
    %81 = vector.load %arg8[%c0_30, %c0_31] : memref<16x1xf32, #tpu.memory_space<vmem>>, vector<16x1xf32>
    tpu.vector_store %arg8[%c0_30, %c0_31], %80 {strides = array<i32>} : memref<16x1xf32, #tpu.memory_space<vmem>>, vector<16x1xf32>,
    return
  }
  func.func @transform_0(%arg0: i32) -> i32 {
    %c0_i32 = arith.constant 0 : i32
    %c0_i32_0 = arith.constant 0 : i32
    return %c0_i32 : i32
  }
  func.func @transform_1(%arg0: i32) -> (i32, i32) {
    %c0_i32 = arith.constant 0 : i32
    %c0_i32_0 = arith.constant 0 : i32
    return %arg0, %c0_i32 : i32, i32
  }
  func.func @transform_2(%arg0: i32) -> (i32, i32) {
    %c0_i32 = arith.constant 0 : i32
    %c0_i32_0 = arith.constant 0 : i32
    return %arg0, %c0_i32 : i32, i32
  }
  func.func @transform_3(%arg0: i32) -> (i32, i32) {
    %c0_i32 = arith.constant 0 : i32
    %c0_i32_0 = arith.constant 0 : i32
    %c0_i32_1 = arith.constant 0 : i32
    return %c0_i32, %c0_i32_0 : i32, i32
  }
  func.func @transform_4(%arg0: i32) -> (i32, i32) {
    %c0_i32 = arith.constant 0 : i32
    %c0_i32_0 = arith.constant 0 : i32
    %c0_i32_1 = arith.constant 0 : i32
    return %c0_i32, %c0_i32_0 : i32, i32
  }
  func.func @transform_5(%arg0: i32) -> (i32, i32) {
    %c0_i32 = arith.constant 0 : i32
    %c0_i32_0 = arith.constant 0 : i32
    %c0_i32_1 = arith.constant 0 : i32
    return %c0_i32, %c0_i32_0 : i32, i32
  }
  func.func @transform_6(%arg0: i32) -> (i32, i32) {
    %c0_i32 = arith.constant 0 : i32
    %c0_i32_0 = arith.constant 0 : i32
    %c0_i32_1 = arith.constant 0 : i32
    return %c0_i32, %c0_i32_0 : i32, i32
  }
  func.func @transform_7(%arg0: i32) -> (i32, i32) {
    %c0_i32 = arith.constant 0 : i32
    %c0_i32_0 = arith.constant 0 : i32
    return %arg0, %c0_i32 : i32, i32
  }
}

</mosaic_0001>

<llo_original>
// kernel: tpu_custom_call.1
$region0: #{tpu_custom_call.1}
  #allocation0 [shape = 'u32[]', space=smem, size = 0x4, offset = 0x4, fixed_abs, tag = 'smem constant byte address 0x4 - core index']
  #allocation1 [shape = 'u32[144,128]{1,0:T(1,128)}', space=vmem, size = 0x12000, scoped, tag = 'internal scratch']
  %s0 = inlined_call_operand.vmem [shape: f32[2], index: 0, kind: input, shape index: {}]
  %s1 = inlined_call_operand.vmem [shape: bf16[32,32], index: 1, kind: input, shape index: {}]
  %s2 = inlined_call_operand.vmem [shape: f32[32,8], index: 2, kind: input, shape index: {}]
  %s3 = inlined_call_operand.vmem [shape: bf16[32,32], index: 3, kind: input, shape index: {}]
  %s4 = inlined_call_operand.vmem [shape: f32[1,32], index: 4, kind: input, shape index: {}]
  %s5 = inlined_call_operand.vmem [shape: f32[32,8], index: 5, kind: input, shape index: {}]
  %s6 = inlined_call_operand.vmem [shape: f32[1,8], index: 6, kind: input, shape index: {}]
  %s7 = inlined_call_operand.vmem [shape: f32[32,1], index: 7, kind: output, shape index: {}]
  %s8 = sld [smem:[#allocation0]]
  $region65: #{tpu_custom_call.1} parent=0
    _
  %s10 = ssub.s32 1, %s8
  %s11 = scalar_select 0, %s10, %s8
  $region1: #{tpu_custom_call.1} parent=0
    #allocation2 [shape = 'u8[512]{0}', space=smem, size = 0x200, scoped, tag = 'input window, operand 0, single buffered']
    #allocation3 [shape = 's32[2]{0}', space=sflag, size = 0x8, scoped, tag = 'scoped memory for tpu_custom_call.1']
    %12 = vsyncpa [#allocation3], 0
    loop: start=0, step=1, limit=4
    $region2: #{tpu_custom_call.1} parent=1 // loop_pre_header
      _
    $region3: #{tpu_custom_call.1} parent=1 // loop_header
      %s14 = sphi 0, %s18
      %p15 = scmp.ge.s32.totalorder %s14, 4
      %s22 = sphi 0, %s22
      %s24 = sphi 0, %s22
      %s25 = sphi 0, %s24
      %s39 = sphi 0, %s25
      %s45 = sphi 0, %s47
      %s48 = sphi 0, %s45
      %s49 = sphi 0, %s48
      %s65 = sphi 0, %s49
      %s71 = sphi 0, %s73
      %s74 = sphi 0, %s71
      %s75 = sphi 0, %s74
      %s91 = sphi 0, %s75
      %s95 = sphi 0, %s95
      %s97 = sphi 0, %s95
      %s98 = sphi 0, %s97
      %s112 = sphi 0, %s98
      %s116 = sphi 0, %s116
      %s118 = sphi 0, %s116
      %s119 = sphi 0, %s118
      %s133 = sphi 0, %s119
      %s137 = sphi 0, %s137
      %s139 = sphi 0, %s137
      %s140 = sphi 0, %s139
      %s154 = sphi 0, %s140
      %s158 = sphi 0, %s158
      %s160 = sphi 0, %s158
      %s161 = sphi 0, %s160
      %s175 = sphi 0, %s161
      %s181 = sphi 0, %s183
      %s184 = sphi 0, %s181
      %s185 = sphi 0, %s184
      %s201 = sphi 0, %s185
    $region4: #{tpu_custom_call.1} parent=1 // loop_header_branch
      %17 = sbr.rel (%p15) target = $region8
    $region5: #{tpu_custom_call.1} parent=1 // loop_body
      %s19 = ssub.s32 %s14, 1
      %s20 = ssub.s32 %s14, 2
      %s21 = sadd.s32 %s14, 1
      %s23 = sadd.s32 %s22, 1
      %p26 = scmp.eq.s32.totalorder %s14, 1
      %p27 = scmp.ne.s32.totalorder %s22, %s24
      %p28 = scmp.eq.s32.totalorder %s14, 0
      %p29 = por %p27, %p28
      %p30 = scmp.ne.s32.totalorder %s22, %s24
      %p31 = scmp.eq.s32.totalorder %s19, 1
      %p32 = por %p30, %p31
      %p33 = scmp.ne.s32.totalorder %s24, %s25
      %p34 = scmp.eq.s32.totalorder %s19, 0
      %p35 = por %p33, %p34
      %p36 = scmp.ne.s32.totalorder %s24, %s25
      %p37 = scmp.eq.s32.totalorder %s20, 1
      %p38 = por %p36, %p37
      %p40 = scmp.ne.s32.totalorder %s25, %s39
      %p41 = scmp.eq.s32.totalorder %s20, 0
      %p42 = por %p40, %p41
      %s43 = ssub.s32 %s14, %s21
      %p44 = scmp.eq.s32.totalorder %s43, 0
      %s46 = sadd.s32 %s45, 1
      %s47 = scalar_select %p44, %s45, %s46
      %p50 = pneg %p44
      %p51 = scmp.eq.s32.totalorder %s14, 1
      %p52 = por %p50, %p51
      %p53 = scmp.ne.s32.totalorder %s45, %s48
      %p54 = scmp.eq.s32.totalorder %s14, 0
      %p55 = por %p53, %p54
      %p56 = scmp.ne.s32.totalorder %s45, %s48
      %p57 = scmp.eq.s32.totalorder %s19, 1
      %p58 = por %p56, %p57
      %p59 = scmp.ne.s32.totalorder %s48, %s49
      %p60 = scmp.eq.s32.totalorder %s19, 0
      %p61 = por %p59, %p60
      %p62 = scmp.ne.s32.totalorder %s48, %s49
      %p63 = scmp.eq.s32.totalorder %s20, 1
      %p64 = por %p62, %p63
      %p66 = scmp.ne.s32.totalorder %s49, %s65
      %p67 = scmp.eq.s32.totalorder %s20, 0
      %p68 = por %p66, %p67
      %s69 = ssub.s32 %s14, %s21
      %p70 = scmp.eq.s32.totalorder %s69, 0
      %s72 = sadd.s32 %s71, 1
      %s73 = scalar_select %p70, %s71, %s72
      %p76 = pneg %p70
      %p77 = scmp.eq.s32.totalorder %s14, 1
      %p78 = por %p76, %p77
      %p79 = scmp.ne.s32.totalorder %s71, %s74
      %p80 = scmp.eq.s32.totalorder %s14, 0
      %p81 = por %p79, %p80
      %p82 = scmp.ne.s32.totalorder %s71, %s74
      %p83 = scmp.eq.s32.totalorder %s19, 1
      %p84 = por %p82, %p83
      %p85 = scmp.ne.s32.totalorder %s74, %s75
      %p86 = scmp.eq.s32.totalorder %s19, 0
      %p87 = por %p85, %p86
      %p88 = scmp.ne.s32.totalorder %s74, %s75
      %p89 = scmp.eq.s32.totalorder %s20, 1
      %p90 = por %p88, %p89
      %p92 = scmp.ne.s32.totalorder %s75, %s91
      %p93 = scmp.eq.s32.totalorder %s20, 0
      %p94 = por %p92, %p93
      %s96 = sadd.s32 %s95, 1
      %p99 = scmp.eq.s32.totalorder %s14, 1
      %p100 = scmp.ne.s32.totalorder %s95, %s97
      %p101 = scmp.eq.s32.totalorder %s14, 0
      %p102 = por %p100, %p101
      %p103 = scmp.ne.s32.totalorder %s95, %s97
      %p104 = scmp.eq.s32.totalorder %s19, 1
      %p105 = por %p103, %p104
      %p106 = scmp.ne.s32.totalorder %s97, %s98
      %p107 = scmp.eq.s32.totalorder %s19, 0
      %p108 = por %p106, %p107
      %p109 = scmp.ne.s32.totalorder %s97, %s98
      %p110 = scmp.eq.s32.totalorder %s20, 1
      %p111 = por %p109, %p110
      %p113 = scmp.ne.s32.totalorder %s98, %s112
      %p114 = scmp.eq.s32.totalorder %s20, 0
      %p115 = por %p113, %p114
      %s117 = sadd.s32 %s116, 1
      %p120 = scmp.eq.s32.totalorder %s14, 1
      %p121 = scmp.ne.s32.totalorder %s116, %s118
      %p122 = scmp.eq.s32.totalorder %s14, 0
      %p123 = por %p121, %p122
      %p124 = scmp.ne.s32.totalorder %s116, %s118
      %p125 = scmp.eq.s32.totalorder %s19, 1
      %p126 = por %p124, %p125
      %p127 = scmp.ne.s32.totalorder %s118, %s119
      %p128 = scmp.eq.s32.totalorder %s19, 0
      %p129 = por %p127, %p128
      %p130 = scmp.ne.s32.totalorder %s118, %s119
      %p131 = scmp.eq.s32.totalorder %s20, 1
      %p132 = por %p130, %p131
      %p134 = scmp.ne.s32.totalorder %s119, %s133
      %p135 = scmp.eq.s32.totalorder %s20, 0
      %p136 = por %p134, %p135
      %s138 = sadd.s32 %s137, 1
      %p141 = scmp.eq.s32.totalorder %s14, 1
      %p142 = scmp.ne.s32.totalorder %s137, %s139
      %p143 = scmp.eq.s32.totalorder %s14, 0
      %p144 = por %p142, %p143
      %p145 = scmp.ne.s32.totalorder %s137, %s139
      %p146 = scmp.eq.s32.totalorder %s19, 1
      %p147 = por %p145, %p146
      %p148 = scmp.ne.s32.totalorder %s139, %s140
      %p149 = scmp.eq.s32.totalorder %s19, 0
      %p150 = por %p148, %p149
      %p151 = scmp.ne.s32.totalorder %s139, %s140
      %p152 = scmp.eq.s32.totalorder %s20, 1
      %p153 = por %p151, %p152
      %p155 = scmp.ne.s32.totalorder %s140, %s154
      %p156 = scmp.eq.s32.totalorder %s20, 0
      %p157 = por %p155, %p156
      %s159 = sadd.s32 %s158, 1
      %p162 = scmp.eq.s32.totalorder %s14, 1
      %p163 = scmp.ne.s32.totalorder %s158, %s160
      %p164 = scmp.eq.s32.totalorder %s14, 0
      %p165 = por %p163, %p164
      %p166 = scmp.ne.s32.totalorder %s158, %s160
      %p167 = scmp.eq.s32.totalorder %s19, 1
      %p168 = por %p166, %p167
      %p169 = scmp.ne.s32.totalorder %s160, %s161
      %p170 = scmp.eq.s32.totalorder %s19, 0
      %p171 = por %p169, %p170
      %p172 = scmp.ne.s32.totalorder %s160, %s161
      %p173 = scmp.eq.s32.totalorder %s20, 1
      %p174 = por %p172, %p173
      %p176 = scmp.ne.s32.totalorder %s161, %s175
      %p177 = scmp.eq.s32.totalorder %s20, 0
      %p178 = por %p176, %p177
      %s179 = ssub.s32 %s14, %s21
      %p180 = scmp.eq.s32.totalorder %s179, 0
      %s182 = sadd.s32 %s181, 1
      %s183 = scalar_select %p180, %s181, %s182
      %p186 = pneg %p180
      %p187 = scmp.eq.s32.totalorder %s14, 1
      %p188 = por %p186, %p187
      %p189 = scmp.ne.s32.totalorder %s181, %s184
      %p190 = scmp.eq.s32.totalorder %s14, 0
      %p191 = por %p189, %p190
      %p192 = scmp.ne.s32.totalorder %s181, %s184
      %p193 = scmp.eq.s32.totalorder %s19, 1
      %p194 = por %p192, %p193
      %p195 = scmp.ne.s32.totalorder %s184, %s185
      %p196 = scmp.eq.s32.totalorder %s19, 0
      %p197 = por %p195, %p196
      %p198 = scmp.ne.s32.totalorder %s184, %s185
      %p199 = scmp.eq.s32.totalorder %s20, 1
      %p200 = por %p198, %p199
      %p202 = scmp.ne.s32.totalorder %s185, %s201
      %p203 = scmp.eq.s32.totalorder %s20, 0
      %p204 = por %p202, %p203
      %p205 = scmp.le.s32.totalorder 1, %s14
      %p206 = scmp.lt.s32.totalorder %s14, 3
      %p207 = pnand %p205, %p206
      %p208 = pneg %p207
      // Predicated region
      $region9: #{tpu_custom_call.1} parent=5 // pred_check
        _
      $region10: #{tpu_custom_call.1} parent=5 // pred_check_branch
        %210 = sbr.rel (%p207) target = $region12
      $region11: #{tpu_custom_call.1} parent=5 // pred_region
        %s211 = ssub.s32 %s14, 1
        // Predicated region
        $region13: #{tpu_custom_call.1} parent=11 // pred_check
          %p212 = pneg %p35
        $region14: #{tpu_custom_call.1} parent=11 // pred_check_branch
          %214 = sbr.rel (%p212) target = $region16
        $region15: #{tpu_custom_call.1} parent=11 // pred_region
          %s216 = ssub.s32 16, 16
          %217 = vsyncadd [#allocation3], %s216
          %s219 = sshll.u32 %s0, 4
          %s220 = int_to_ptr.vmem [resolvable:$true] %s219
          %222 = dma.vmem_to_smem %s220, 16, [#allocation2], [#allocation3]
        $region16: #{tpu_custom_call.1} parent=11 // pred_fallthru
          _
        // Predicated region
        $region17: #{tpu_custom_call.1} parent=11 // pred_check
          %p223 = pneg %p108
        $region18: #{tpu_custom_call.1} parent=11 // pred_check_branch
          %225 = sbr.rel (%p223) target = $region20
        $region19: #{tpu_custom_call.1} parent=11 // pred_region
          _
        $region20: #{tpu_custom_call.1} parent=11 // pred_fallthru
          _
        // Predicated region
        $region21: #{tpu_custom_call.1} parent=11 // pred_check
          %p226 = pneg %p129
        $region22: #{tpu_custom_call.1} parent=11 // pred_check_branch
          %228 = sbr.rel (%p226) target = $region24
        $region23: #{tpu_custom_call.1} parent=11 // pred_region
          _
        $region24: #{tpu_custom_call.1} parent=11 // pred_fallthru
          _
        // Predicated region
        $region25: #{tpu_custom_call.1} parent=11 // pred_check
          %p229 = pneg %p150
        $region26: #{tpu_custom_call.1} parent=11 // pred_check_branch
          %231 = sbr.rel (%p229) target = $region28
        $region27: #{tpu_custom_call.1} parent=11 // pred_region
          _
        $region28: #{tpu_custom_call.1} parent=11 // pred_fallthru
          _
        // Predicated region
        $region29: #{tpu_custom_call.1} parent=11 // pred_check
          %p232 = pneg %p171
        $region30: #{tpu_custom_call.1} parent=11 // pred_check_branch
          %234 = sbr.rel (%p232) target = $region32
        $region31: #{tpu_custom_call.1} parent=11 // pred_region
          _
        $region32: #{tpu_custom_call.1} parent=11 // pred_fallthru
          _
      $region12: #{tpu_custom_call.1} parent=5 // pred_fallthru
        _
      %p235 = scmp.lt.s32.totalorder %s14, 2
      // Predicated region
      $region33: #{tpu_custom_call.1} parent=5 // pred_check
        %p236 = pneg %p235
      $region34: #{tpu_custom_call.1} parent=5 // pred_check_branch
        %238 = sbr.rel (%p236) target = $region36
      $region35: #{tpu_custom_call.1} parent=5 // pred_region
        // Predicated region
        $region37: #{tpu_custom_call.1} parent=35 // pred_check
          %p239 = pneg %p55
        $region38: #{tpu_custom_call.1} parent=35 // pred_check_branch
          %241 = sbr.rel (%p239) target = $region40
        $region39: #{tpu_custom_call.1} parent=35 // pred_region
          %s242 = smul.u32 2, %s14
          %p243 = scmp.lt.s32.totalorder %s242, 3
          %s244 = scalar_select %p243, %s242, 3
          %s245 = smul.addr %s244, 4
          %s246 = scalar_lea.vmem %s1, %s245
          %s247 = smul.u32 2, %s14
        $region40: #{tpu_custom_call.1} parent=35 // pred_fallthru
          _
        // Predicated region
        $region41: #{tpu_custom_call.1} parent=35 // pred_check
          %p248 = pneg %p81
        $region42: #{tpu_custom_call.1} parent=35 // pred_check_branch
          %250 = sbr.rel (%p248) target = $region44
        $region43: #{tpu_custom_call.1} parent=35 // pred_region
          %s251 = smul.u32 2, %s14
          %p252 = scmp.lt.s32.totalorder %s251, 3
          %s253 = scalar_select %p252, %s251, 3
          %s254 = smul.addr %s253, 8
          %s255 = scalar_lea.vmem %s2, %s254
          %s256 = smul.u32 2, %s14
        $region44: #{tpu_custom_call.1} parent=35 // pred_fallthru
          _
      $region36: #{tpu_custom_call.1} parent=5 // pred_fallthru
        _
      %p257 = scmp.le.s32.totalorder 1, %s14
      %p258 = scmp.lt.s32.totalorder %s14, 3
      %p259 = pnand %p257, %p258
      %p260 = pneg %p259
      // Predicated region
      $region45: #{tpu_custom_call.1} parent=5 // pred_check
        _
      $region46: #{tpu_custom_call.1} parent=5 // pred_check_branch
        %262 = sbr.rel (%p259) target = $region48
      $region47: #{tpu_custom_call.1} parent=5 // pred_region
        %s263 = ssub.s32 %s14, 1
        // Predicated region
        $region49: #{tpu_custom_call.1} parent=47 // pred_check
          %p264 = pneg %p35
        $region50: #{tpu_custom_call.1} parent=47 // pred_check_branch
          %266 = sbr.rel (%p264) target = $region52
        $region51: #{tpu_custom_call.1} parent=47 // pred_region
          %267 = dma.done [#allocation3], 16
        $region52: #{tpu_custom_call.1} parent=47 // pred_fallthru
          _
        %268 = sfence
        %p269 = pneg %p35
        %p270 = pneg %p32
        %s271 = smul.u32 2, %s19
        %p272 = scmp.lt.s32.totalorder %s271, 3
        %s273 = scalar_select %p272, %s271, 3
        %s274 = smul.addr %s273, 4
        %s275 = scalar_lea.vmem %s1, %s274
        %p276 = pneg %p61
        %p277 = pneg %p58
        %s278 = smul.u32 2, %s19
        %p279 = scmp.lt.s32.totalorder %s278, 3
        %s280 = scalar_select %p279, %s278, 3
        %s281 = smul.addr %s280, 8
        %s282 = scalar_lea.vmem %s2, %s281
        %p283 = pneg %p87
        %p284 = pneg %p84
        %p285 = pneg %p108
        %p286 = pneg %p105
        %p287 = pneg %p129
        %p288 = pneg %p126
        %p289 = pneg %p150
        %p290 = pneg %p147
        %p291 = pneg %p171
        %p292 = pneg %p168
        %p293 = pneg %p197
        %p294 = pneg %p194
        %s295 = smul.u32 2, %s19
        %p296 = scmp.lt.s32.totalorder %s295, 3
        %s297 = scalar_select %p296, %s295, 3
        %s298 = smul.addr %s297, 8
        %s299 = scalar_lea.vmem %s7, %s298
        %s300 = smul.u32 2, %s19
        %p301 = scmp.lt.s32.totalorder %s300, 3
        %s302 = scalar_select %p301, %s300, 3
        %s303 = smul.addr %s302, 4
        %s304 = scalar_lea.vmem %s1, %s303
        %s305 = smul.u32 2, %s19
        %s306 = smul.u32 2, %s19
        %p307 = scmp.lt.s32.totalorder %s306, 3
        %s308 = scalar_select %p307, %s306, 3
        %s309 = smul.addr %s308, 8
        %s310 = scalar_lea.vmem %s2, %s309
        %s311 = smul.u32 2, %s19
        %s312 = smul.u32 2, %s19
        %p313 = scmp.lt.s32.totalorder %s312, 3
        %s314 = scalar_select %p313, %s312, 3
        %s315 = smul.addr %s314, 8
        %s316 = scalar_lea.vmem %s7, %s315
        %s317 = smul.u32 2, %s19
        %s319 = sld [smem:[#allocation2]]
        %s320 = sld [smem:[#allocation2 + $0x1]]
        %v321 = vld [vmem:[%s304] sm:$0xf]
        %v322 = vld [vmem:[%s304 + $0x4] sm:$0xf]
        %v323 = vunpack.c.l.bf16 %v321
        %v324 = vunpack.c.l.bf16 %v322
        %vm325 = vcmask 261120
        %v326 = vsel %vm325, %v323, 0.0
        %327 = vadd.xlane.f32.xlu0 %v326
        %v328 = vpop.xlane.xlu0 %327
        %v329 = vsel %vm325, %v324, 0.0
        %330 = vadd.xlane.f32.xlu0 %v329
        %v331 = vpop.xlane.xlu0 %330
        %v332 = vrcp.pop 32.0
        %v333 = vmul.f32 %v328, %v332
        %v334 = vmul.f32 %v331, %v332
        %v335 = vsub.f32 %v323, %v333
        %v336 = vsub.f32 %v324, %v334
        %v337 = vmul.f32 %v335, %v335
        %v338 = vmul.f32 %v336, %v336
        %v339 = vsel %vm325, %v337, 0.0
        %340 = vadd.xlane.f32.xlu0 %v339
        %v341 = vpop.xlane.xlu0 %340
        %v342 = vsel %vm325, %v338, 0.0
        %343 = vadd.xlane.f32.xlu0 %v342
        %v344 = vpop.xlane.xlu0 %343
        %v345 = vmul.f32 %v341, %v332
        %v346 = vmul.f32 %v344, %v332
        %v347 = vadd.f32 %v345, 1e-05
        %v348 = vadd.f32 %v346, 1e-05
        %v349 = vrsqrt.pop %v347
        %v350 = vrsqrt.pop %v348
        %v351 = vmul.f32 %v335, %v349
        %v352 = vmul.f32 %v336, %v350
        %v353 = vpack.c.bf16 %v352, %v351
        %v354 = vld [vmem:[%s3] sm:$0xf]
        %v355 = vld [vmem:[%s3 + $0x4] sm:$0xf]
        %v356 = vld [vmem:[%s3 + $0x8] sm:$0xf]
        %v357 = vld [vmem:[%s3 + $0xc] sm:$0xf]
        %v358 = vld [vmem:[%s4] sm:$0x1]
        %v360 = vlaneseq
        %v361 = vshrl.u32 %v360, 7
        %v362 = vsub.s32 0, %v361
        %v363 = vrot.slane %v358, %v362
        %v369 = vunpack.c.l.b16 %v354
        %v370 = vunpack.c.l.b16 %v355
        %v371 = vunpack.c.l.b16 %v356
        %v372 = vunpack.c.l.b16 %v357
        %v373 = vpack.c.b16 %v370, %v369
        %v374 = vpack.c.b16 %v372, %v371
        %v378 = vsel %vm325, %v353, 0
        %380 = vmatprep.subr.bf16.mxu0 0
        %381 = vmatpush1.bf16.msra.mxu0 %v373
        %382 = vmatprep.subr.bf16.mxu0 0
        %383 = vmatpush1.bf16.msra.mxu0 %v374
        %384 = vmatprep.subr.bf16.mxu0 0
        %385 = vmatpush1.bf16.msra.mxu0 0
        %386 = vmatprep.subr.bf16.mxu0 0
        %387 = vmatpush1.bf16.msra.mxu0 0
        %388 = vmatprep.subr.bf16.mxu0 0
        %389 = vmatpush1.bf16.msra.mxu0 0
        %390 = vmatprep.subr.bf16.mxu0 0
        %391 = vmatpush1.bf16.msra.mxu0 0
        %392 = vmatprep.subr.bf16.mxu0 0
        %393 = vmatpush1.bf16.msra.mxu0 0
        %394 = vmatprep.subr.bf16.mxu0 0
        %395 = vmatpush1.bf16.msra.mxu0 0
        %396 = vmatprep.subr.bf16.mxu0 0
        %397 = vmatpush1.bf16.msra.mxu0 0
        %398 = vmatprep.subr.bf16.mxu0 0
        %399 = vmatpush1.bf16.msra.mxu0 0
        %400 = vmatprep.subr.bf16.mxu0 0
        %401 = vmatpush1.bf16.msra.mxu0 0
        %402 = vmatprep.subr.bf16.mxu0 0
        %403 = vmatpush1.bf16.msra.mxu0 0
        %404 = vmatprep.subr.bf16.mxu0 0
        %405 = vmatpush1.bf16.msra.mxu0 0
        %406 = vmatprep.subr.bf16.mxu0 0
        %407 = vmatpush1.bf16.msra.mxu0 0
        %408 = vmatprep.subr.bf16.mxu0 0
        %409 = vmatpush1.bf16.msra.mxu0 0
        %410 = vmatprep.subr.bf16.mxu0 0
        %411 = vmatpush1.bf16.msra.mxu0 0
        %412 = vmatprep.mubr.bf16.mxu0 0
        %413 = vmatmul.mubr.bf16.gmra.mrb[0].mxu0 %v378
        %v414 = vpop.f32.mrb[0].mxu0
        %v415 = vadd.f32 %v363, %v414
        %v416 = vpop.f32.mrb[0].mxu0
        %v417 = vpop.f32.mrb[0].mxu0
        %v418 = vadd.f32 %v363, %v417
        %v419 = vpop.f32.mrb[0].mxu0
        %420 = vdwg.mxu0
        %v421 = vsel %vm325, %v415, 0.0
        %422 = vadd.xlane.f32.xlu0 %v421
        %v423 = vpop.xlane.xlu0 %422
        %v424 = vsel %vm325, %v418, 0.0
        %425 = vadd.xlane.f32.xlu0 %v424
        %v426 = vpop.xlane.xlu0 %425
        %v427 = vmul.f32 %v423, %v332
        %v428 = vmul.f32 %v426, %v332
        %v429 = vsub.f32 %v415, %v427
        %v430 = vsub.f32 %v418, %v428
        %v431 = vmul.f32 %v429, %v429
        %v432 = vmul.f32 %v430, %v430
        %v433 = vsel %vm325, %v431, 0.0
        %434 = vadd.xlane.f32.xlu0 %v433
        %v435 = vpop.xlane.xlu0 %434
        %v436 = vsel %vm325, %v432, 0.0
        %437 = vadd.xlane.f32.xlu0 %v436
        %v438 = vpop.xlane.xlu0 %437
        %v439 = vmul.f32 %v435, %v332
        %v440 = vmul.f32 %v438, %v332
        %v441 = vadd.f32 %v439, 1e-05
        %v442 = vadd.f32 %v440, 1e-05
        %v443 = vrsqrt.pop %v441
        %v444 = vrsqrt.pop %v442
        %v445 = vmul.f32 %v429, %v443
        %v446 = vmul.f32 %v430, %v444
        %v447 = vld [vmem:[%s5] sm:$0xff]
        %v448 = vld [vmem:[%s5 + $0x8] sm:$0xff]
        %v449 = vld [vmem:[%s5 + $0x10] sm:$0xff]
        %v450 = vld [vmem:[%s5 + $0x18] sm:$0xff]
        %v451 = vld [vmem:[%s6] sm:$0x1]
        %v453 = vlaneseq
        %v454 = vshrl.u32 %v453, 7
        %v455 = vsub.s32 0, %v454
        %v456 = vrot.slane %v451, %v455
        %v459 = vsel %vm325, %v445, 0
        %v462 = vsel %vm325, %v446, 0
        %464 = vmatprep.subr.mxu0 0.0
        %465 = vmatpush1.msra.mxu0 %v447
        %466 = vmatprep.subr.mxu0 0.0
        %467 = vmatpush1.msra.mxu0 %v448
        %468 = vmatprep.subr.mxu0 0.0
        %469 = vmatpush1.msra.mxu0 %v449
        %470 = vmatprep.subr.mxu0 0.0
        %471 = vmatpush1.msra.mxu0 %v450
        %472 = vmatprep.subr.mxu0 0.0
        %473 = vmatpush1.msra.mxu0 0.0
        %474 = vmatprep.subr.mxu0 0.0
        %475 = vmatpush1.msra.mxu0 0.0
        %476 = vmatprep.subr.mxu0 0.0
        %477 = vmatpush1.msra.mxu0 0.0
        %478 = vmatprep.subr.mxu0 0.0
        %479 = vmatpush1.msra.mxu0 0.0
        %480 = vmatprep.subr.mxu0 0.0
        %481 = vmatpush1.msra.mxu0 0.0
        %482 = vmatprep.subr.mxu0 0.0
        %483 = vmatpush1.msra.mxu0 0.0
        %484 = vmatprep.subr.mxu0 0.0
        %485 = vmatpush1.msra.mxu0 0.0
        %486 = vmatprep.subr.mxu0 0.0
        %487 = vmatpush1.msra.mxu0 0.0
        %488 = vmatprep.subr.mxu0 0.0
        %489 = vmatpush1.msra.mxu0 0.0
        %490 = vmatprep.subr.mxu0 0.0
        %491 = vmatpush1.msra.mxu0 0.0
        %492 = vmatprep.subr.mxu0 0.0
        %493 = vmatpush1.msra.mxu0 0.0
        %494 = vmatprep.subr.mxu0 0.0
        %495 = vmatpush1.msra.mxu0 0.0
        %496 = vmatprep.subr.mxu0 0.0
        %497 = vmatpush1.msra.mxu0 0.0
        %498 = vmatprep.subr.mxu0 0.0
        %499 = vmatpush1.msra.mxu0 0.0
        %500 = vmatprep.subr.mxu0 0.0
        %501 = vmatpush1.msra.mxu0 0.0
        %502 = vmatprep.subr.mxu0 0.0
        %503 = vmatpush1.msra.mxu0 0.0
        %504 = vmatprep.subr.mxu0 0.0
        %505 = vmatpush1.msra.mxu0 0.0
        %506 = vmatprep.subr.mxu0 0.0
        %507 = vmatpush1.msra.mxu0 0.0
        %508 = vmatprep.subr.mxu0 0.0
        %509 = vmatpush1.msra.mxu0 0.0
        %510 = vmatprep.subr.mxu0 0.0
        %511 = vmatpush1.msra.mxu0 0.0
        %512 = vmatprep.subr.mxu0 0.0
        %513 = vmatpush1.msra.mxu0 0.0
        %514 = vmatprep.subr.mxu0 0.0
        %515 = vmatpush1.msra.mxu0 0.0
        %516 = vmatprep.subr.mxu0 0.0
        %517 = vmatpush1.msra.mxu0 0.0
        %518 = vmatprep.subr.mxu0 0.0
        %519 = vmatpush1.msra.mxu0 0.0
        %520 = vmatprep.subr.mxu0 0.0
        %521 = vmatpush1.msra.mxu0 0.0
        %522 = vmatprep.subr.mxu0 0.0
        %523 = vmatpush1.msra.mxu0 0.0
        %524 = vmatprep.subr.mxu0 0.0
        %525 = vmatpush1.msra.mxu0 0.0
        %526 = vmatprep.subr.mxu0 0.0
        %527 = vmatpush1.msra.mxu0 0.0
        %528 = vmatprep.mubr.f32.mxu0 0.0
        %529 = vmatmul.mubr.f32.gmra.mrb[0].mxu0 %v459
        %v530 = vpop.f32.mrb[0].mxu0
        %v531 = vadd.f32 %v456, %v530
        %v532 = vpop.f32.mrb[0].mxu0
        %533 = vmatprep.mubr.f32.mxu0 0.0
        %534 = vmatmul.mubr.f32.gmra.mrb[0].mxu0 %v462
        %v535 = vpop.f32.mrb[0].mxu0
        %v536 = vadd.f32 %v456, %v535
        %v537 = vpop.f32.mrb[0].mxu0
        %538 = vdwg.mxu0
        %vm539 = vcmask 64512
        %v540 = vsel %vm539, %v531, -inf
        %541 = vmax.xlane.f32.xlu0 %v540
        %v542 = vpop.xlane.xlu0 %541
        %v543 = vsel %vm539, %v536, -inf
        %544 = vmax.xlane.f32.xlu0 %v543
        %v545 = vpop.xlane.xlu0 %544
        %v546 = vsub.f32 %v531, %v542
        %v547 = vsub.f32 %v536, %v545
        %v548 = vmul.f32 %v546, 1.442695
        %v549 = vpow.pop %v548
        %v550 = vmul.f32 %v547, 1.442695
        %v551 = vpow.pop %v550
        %v552 = vld [vmem:[%s310] sm:$0xff]
        %v553 = vld [vmem:[%s310 + $0x8] sm:$0xff]
        %v554 = vmul.f32 %v549, %v552
        %v555 = vmul.f32 %v551, %v553
        %v556 = vsel %vm539, %v554, 0.0
        %557 = vadd.xlane.f32.xlu0 %v556
        %v558 = vpop.xlane.xlu0 %557
        %v559 = vsel %vm539, %v555, 0.0
        %560 = vadd.xlane.f32.xlu0 %v559
        %v561 = vpop.xlane.xlu0 %560
        %v562 = vsel %vm539, %v549, 0.0
        %563 = vadd.xlane.f32.xlu0 %v562
        %v564 = vpop.xlane.xlu0 %563
        %v565 = vsel %vm539, %v551, 0.0
        %566 = vadd.xlane.f32.xlu0 %v565
        %v567 = vpop.xlane.xlu0 %566
        %v568 = vrcp.pop %v564
        %v569 = vmul.f32 %v558, %v568
        %v570 = vrcp.pop %v567
        %v571 = vmul.f32 %v561, %v570
        %v572 = vmax.f32 %v569, 0.0001
        %v573 = vmax.f32 %v571, 0.0001
        %v574 = vmin.f32 %v572, 0.9999
        %v575 = vmin.f32 %v573, 0.9999
        %v576 = vlog2.pop %v574
        %v577 = vmul.f32 %v576, 0.6931472
        %v578 = vlog2.pop %v575
        %v579 = vmul.f32 %v578, 0.6931472
        %v580 = vsub.f32 1.0, %v574
        %v581 = vsub.f32 1.0, %v575
        %v582 = vlog2.pop %v580
        %v583 = vmul.f32 %v582, 0.6931472
        %v584 = vlog2.pop %v581
        %v585 = vmul.f32 %v584, 0.6931472
        %v586 = vsub.f32 %v577, %v583
        %v587 = vsub.f32 %v579, %v585
        %v588 = vstv %s319
        %v589 = vmul.f32 %v588, %v586
        %v590 = vmul.f32 %v588, %v587
        %v591 = vstv %s320
        %v592 = vadd.f32 %v589, %v591
        %v593 = vadd.f32 %v590, %v591
        %v594 = vxor.u32 %v592, 2147483648
        %v595 = vxor.u32 %v593, 2147483648
        %v596 = vmul.f32 %v594, 1.442695
        %v597 = vpow.pop %v596
        %v598 = vmul.f32 %v595, 1.442695
        %v599 = vpow.pop %v598
        %v600 = vadd.f32 %v597, 1.0
        %v601 = vadd.f32 %v599, 1.0
        %v602 = vrcp.pop %v600
        %v603 = vmul.f32 1.0, %v602
        %v604 = vrcp.pop %v601
        %v605 = vmul.f32 1.0, %v604
        %vm606 = vcmask 7168
        %607 = vst.msk [vmem:[%s316] sm:$0xff] %vm606, %v603
        %608 = vst.msk [vmem:[%s316 + $0x8] sm:$0xff] %vm606, %v605
        %s609 = smul.u32 2, %s19
        %p610 = scmp.lt.s32.totalorder %s609, 3
        %s611 = scalar_select %p610, %s609, 3
        %s612 = smul.addr %s611, 8
        %s613 = scalar_lea.vmem %s7, %s612
        // Predicated region
        $region53: #{tpu_custom_call.1} parent=47 // pred_check
          %p614 = pneg %p194
        $region54: #{tpu_custom_call.1} parent=47 // pred_check_branch
          %616 = sbr.rel (%p614) target = $region56
        $region55: #{tpu_custom_call.1} parent=47 // pred_region
          %s617 = smul.u32 2, %s19
        $region56: #{tpu_custom_call.1} parent=47 // pred_fallthru
          _
      $region48: #{tpu_custom_call.1} parent=5 // pred_fallthru
        _
      %p618 = scmp.le.s32.totalorder 2, %s14
      // Predicated region
      $region57: #{tpu_custom_call.1} parent=5 // pred_check
        %p619 = pneg %p618
      $region58: #{tpu_custom_call.1} parent=5 // pred_check_branch
        %621 = sbr.rel (%p619) target = $region60
      $region59: #{tpu_custom_call.1} parent=5 // pred_region
        %s622 = ssub.s32 %s14, 2
        // Predicated region
        $region61: #{tpu_custom_call.1} parent=59 // pred_check
          %p623 = pneg %p200
        $region62: #{tpu_custom_call.1} parent=59 // pred_check_branch
          %625 = sbr.rel (%p623) target = $region64
        $region63: #{tpu_custom_call.1} parent=59 // pred_region
          %s626 = smul.u32 2, %s20
          %p627 = scmp.lt.s32.totalorder %s626, 3
          %s628 = scalar_select %p627, %s626, 3
          %s629 = smul.addr %s628, 8
          %s630 = scalar_lea.vmem %s7, %s629
        $region64: #{tpu_custom_call.1} parent=59 // pred_fallthru
          _
      $region60: #{tpu_custom_call.1} parent=5 // pred_fallthru
        _
    $region6: #{tpu_custom_call.1} parent=1 // loop_footer
      %s18 = sadd.s32 1, %s14
    $region7: #{tpu_custom_call.1} parent=1 // loop_footer_branch
      %13 = sbr.rel target = $region3
    $region8: #{tpu_custom_call.1} parent=1 // loop_exit
      _
    %631 = vsyncpa [#allocation3], 1
    %s632 = scalar_lea.sflag [#allocation3], 1
    %633 = vsyncpa %s632, 1

// kernel: tpu_custom_call.1
$region0: #{tpu_custom_call.1}
  #allocation0 [shape = 'u32[]', space=smem, size = 0x4, offset = 0x4, fixed_abs, tag = 'smem constant byte address 0x4 - core index']
  #allocation1 [shape = 'u32[144,128]{1,0:T(1,128)}', space=vmem, size = 0x12000, scoped, tag = 'internal scratch']
  %s0 = inlined_call_operand.vmem [shape: f32[2], index: 0, kind: input, shape index: {}]
  %s1 = inlined_call_operand.vmem [shape: bf16[32,32], index: 1, kind: input, shape index: {}]
  %s2 = inlined_call_operand.vmem [shape: f32[32,8], index: 2, kind: input, shape index: {}]
  %s3 = inlined_call_operand.vmem [shape: bf16[32,32], index: 3, kind: input, shape index: {}]
  %s4 = inlined_call_operand.vmem [shape: f32[1,32], index: 4, kind: input, shape index: {}]
  %s5 = inlined_call_operand.vmem [shape: f32[32,8], index: 5, kind: input, shape index: {}]
  %s6 = inlined_call_operand.vmem [shape: f32[1,8], index: 6, kind: input, shape index: {}]
  %s7 = inlined_call_operand.vmem [shape: f32[32,1], index: 7, kind: output, shape index: {}]
  %s8 = sld [smem:[#allocation0]]
  $region65: #{tpu_custom_call.1} parent=0
    _
  %s10 = ssub.s32 1, %s8
  %s11 = scalar_select 0, %s10, %s8
  $region1: #{tpu_custom_call.1} parent=0
    #allocation2 [shape = 'u8[512]{0}', space=smem, size = 0x200, scoped, tag = 'input window, operand 0, single buffered']
    #allocation3 [shape = 's32[2]{0}', space=sflag, size = 0x8, scoped, tag = 'scoped memory for tpu_custom_call.1']
    %12 = vsyncpa [#allocation3], 0
    loop: start=0, step=1, limit=4
    $region2: #{tpu_custom_call.1} parent=1 // loop_pre_header
      _
    $region3: #{tpu_custom_call.1} parent=1 // loop_header
      %s14 = sphi 0, %s18
      %p15 = scmp.ge.s32.totalorder %s14, 4
      %s22 = sphi 0, %s22
      %s24 = sphi 0, %s22
      %s25 = sphi 0, %s24
      %s39 = sphi 0, %s25
      %s45 = sphi 0, %s47
      %s48 = sphi 0, %s45
      %s49 = sphi 0, %s48
      %s65 = sphi 0, %s49
      %s71 = sphi 0, %s73
      %s74 = sphi 0, %s71
      %s75 = sphi 0, %s74
      %s91 = sphi 0, %s75
      %s95 = sphi 0, %s95
      %s97 = sphi 0, %s95
      %s98 = sphi 0, %s97
      %s112 = sphi 0, %s98
      %s116 = sphi 0, %s116
      %s118 = sphi 0, %s116
      %s119 = sphi 0, %s118
      %s133 = sphi 0, %s119
      %s137 = sphi 0, %s137
      %s139 = sphi 0, %s137
      %s140 = sphi 0, %s139
      %s154 = sphi 0, %s140
      %s158 = sphi 0, %s158
      %s160 = sphi 0, %s158
      %s161 = sphi 0, %s160
      %s175 = sphi 0, %s161
      %s181 = sphi 0, %s183
      %s184 = sphi 0, %s181
      %s185 = sphi 0, %s184
      %s201 = sphi 0, %s185
    $region4: #{tpu_custom_call.1} parent=1 // loop_header_branch
      %17 = sbr.rel (%p15) target = $region8
    $region5: #{tpu_custom_call.1} parent=1 // loop_body
      %s19 = ssub.s32 %s14, 1
      %s20 = ssub.s32 %s14, 2
      %s21 = sadd.s32 %s14, 1
      %s23 = sadd.s32 %s22, 1
      %p26 = scmp.eq.s32.totalorder %s14, 1
      %p27 = scmp.ne.s32.totalorder %s22, %s24
      %p28 = scmp.eq.s32.totalorder %s14, 0
      %p29 = por %p27, %p28
      %p30 = scmp.ne.s32.totalorder %s22, %s24
      %p31 = scmp.eq.s32.totalorder %s19, 1
      %p32 = por %p30, %p31
      %p33 = scmp.ne.s32.totalorder %s24, %s25
      %p34 = scmp.eq.s32.totalorder %s19, 0
      %p35 = por %p33, %p34
      %p36 = scmp.ne.s32.totalorder %s24, %s25
      %p37 = scmp.eq.s32.totalorder %s20, 1
      %p38 = por %p36, %p37
      %p40 = scmp.ne.s32.totalorder %s25, %s39
      %p41 = scmp.eq.s32.totalorder %s20, 0
      %p42 = por %p40, %p41
      %s43 = ssub.s32 %s14, %s21
      %p44 = scmp.eq.s32.totalorder %s43, 0
      %s46 = sadd.s32 %s45, 1
      %s47 = scalar_select %p44, %s45, %s46
      %p50 = pneg %p44
      %p51 = scmp.eq.s32.totalorder %s14, 1
      %p52 = por %p50, %p51
      %p53 = scmp.ne.s32.totalorder %s45, %s48
      %p54 = scmp.eq.s32.totalorder %s14, 0
      %p55 = por %p53, %p54
      %p56 = scmp.ne.s32.totalorder %s45, %s48
      %p57 = scmp.eq.s32.totalorder %s19, 1
      %p58 = por %p56, %p57
      %p59 = scmp.ne.s32.totalorder %s48, %s49
      %p60 = scmp.eq.s32.totalorder %s19, 0
      %p61 = por %p59, %p60
      %p62 = scmp.ne.s32.totalorder %s48, %s49
      %p63 = scmp.eq.s32.totalorder %s20, 1
      %p64 = por %p62, %p63
      %p66 = scmp.ne.s32.totalorder %s49, %s65
      %p67 = scmp.eq.s32.totalorder %s20, 0
      %p68 = por %p66, %p67
      %s69 = ssub.s32 %s14, %s21
      %p70 = scmp.eq.s32.totalorder %s69, 0
      %s72 = sadd.s32 %s71, 1
      %s73 = scalar_select %p70, %s71, %s72
      %p76 = pneg %p70
      %p77 = scmp.eq.s32.totalorder %s14, 1
      %p78 = por %p76, %p77
      %p79 = scmp.ne.s32.totalorder %s71, %s74
      %p80 = scmp.eq.s32.totalorder %s14, 0
      %p81 = por %p79, %p80
      %p82 = scmp.ne.s32.totalorder %s71, %s74
      %p83 = scmp.eq.s32.totalorder %s19, 1
      %p84 = por %p82, %p83
      %p85 = scmp.ne.s32.totalorder %s74, %s75
      %p86 = scmp.eq.s32.totalorder %s19, 0
      %p87 = por %p85, %p86
      %p88 = scmp.ne.s32.totalorder %s74, %s75
      %p89 = scmp.eq.s32.totalorder %s20, 1
      %p90 = por %p88, %p89
      %p92 = scmp.ne.s32.totalorder %s75, %s91
      %p93 = scmp.eq.s32.totalorder %s20, 0
      %p94 = por %p92, %p93
      %s96 = sadd.s32 %s95, 1
      %p99 = scmp.eq.s32.totalorder %s14, 1
      %p100 = scmp.ne.s32.totalorder %s95, %s97
      %p101 = scmp.eq.s32.totalorder %s14, 0
      %p102 = por %p100, %p101
      %p103 = scmp.ne.s32.totalorder %s95, %s97
      %p104 = scmp.eq.s32.totalorder %s19, 1
      %p105 = por %p103, %p104
      %p106 = scmp.ne.s32.totalorder %s97, %s98
      %p107 = scmp.eq.s32.totalorder %s19, 0
      %p108 = por %p106, %p107
      %p109 = scmp.ne.s32.totalorder %s97, %s98
      %p110 = scmp.eq.s32.totalorder %s20, 1
      %p111 = por %p109, %p110
      %p113 = scmp.ne.s32.totalorder %s98, %s112
      %p114 = scmp.eq.s32.totalorder %s20, 0
      %p115 = por %p113, %p114
      %s117 = sadd.s32 %s116, 1
      %p120 = scmp.eq.s32.totalorder %s14, 1
      %p121 = scmp.ne.s32.totalorder %s116, %s118
      %p122 = scmp.eq.s32.totalorder %s14, 0
      %p123 = por %p121, %p122
      %p124 = scmp.ne.s32.totalorder %s116, %s118
      %p125 = scmp.eq.s32.totalorder %s19, 1
      %p126 = por %p124, %p125
      %p127 = scmp.ne.s32.totalorder %s118, %s119
      %p128 = scmp.eq.s32.totalorder %s19, 0
      %p129 = por %p127, %p128
      %p130 = scmp.ne.s32.totalorder %s118, %s119
      %p131 = scmp.eq.s32.totalorder %s20, 1
      %p132 = por %p130, %p131
      %p134 = scmp.ne.s32.totalorder %s119, %s133
      %p135 = scmp.eq.s32.totalorder %s20, 0
      %p136 = por %p134, %p135
      %s138 = sadd.s32 %s137, 1
      %p141 = scmp.eq.s32.totalorder %s14, 1
      %p142 = scmp.ne.s32.totalorder %s137, %s139
      %p143 = scmp.eq.s32.totalorder %s14, 0
      %p144 = por %p142, %p143
      %p145 = scmp.ne.s32.totalorder %s137, %s139
      %p146 = scmp.eq.s32.totalorder %s19, 1
      %p147 = por %p145, %p146
      %p148 = scmp.ne.s32.totalorder %s139, %s140
      %p149 = scmp.eq.s32.totalorder %s19, 0
      %p150 = por %p148, %p149
      %p151 = scmp.ne.s32.totalorder %s139, %s140
      %p152 = scmp.eq.s32.totalorder %s20, 1
      %p153 = por %p151, %p152
      %p155 = scmp.ne.s32.totalorder %s140, %s154
      %p156 = scmp.eq.s32.totalorder %s20, 0
      %p157 = por %p155, %p156
      %s159 = sadd.s32 %s158, 1
      %p162 = scmp.eq.s32.totalorder %s14, 1
      %p163 = scmp.ne.s32.totalorder %s158, %s160
      %p164 = scmp.eq.s32.totalorder %s14, 0
      %p165 = por %p163, %p164
      %p166 = scmp.ne.s32.totalorder %s158, %s160
      %p167 = scmp.eq.s32.totalorder %s19, 1
      %p168 = por %p166, %p167
      %p169 = scmp.ne.s32.totalorder %s160, %s161
      %p170 = scmp.eq.s32.totalorder %s19, 0
      %p171 = por %p169, %p170
      %p172 = scmp.ne.s32.totalorder %s160, %s161
      %p173 = scmp.eq.s32.totalorder %s20, 1
      %p174 = por %p172, %p173
      %p176 = scmp.ne.s32.totalorder %s161, %s175
      %p177 = scmp.eq.s32.totalorder %s20, 0
      %p178 = por %p176, %p177
      %s179 = ssub.s32 %s14, %s21
      %p180 = scmp.eq.s32.totalorder %s179, 0
      %s182 = sadd.s32 %s181, 1
      %s183 = scalar_select %p180, %s181, %s182
      %p186 = pneg %p180
      %p187 = scmp.eq.s32.totalorder %s14, 1
      %p188 = por %p186, %p187
      %p189 = scmp.ne.s32.totalorder %s181, %s184
      %p190 = scmp.eq.s32.totalorder %s14, 0
      %p191 = por %p189, %p190
      %p192 = scmp.ne.s32.totalorder %s181, %s184
      %p193 = scmp.eq.s32.totalorder %s19, 1
      %p194 = por %p192, %p193
      %p195 = scmp.ne.s32.totalorder %s184, %s185
      %p196 = scmp.eq.s32.totalorder %s19, 0
      %p197 = por %p195, %p196
      %p198 = scmp.ne.s32.totalorder %s184, %s185
      %p199 = scmp.eq.s32.totalorder %s20, 1
      %p200 = por %p198, %p199
      %p202 = scmp.ne.s32.totalorder %s185, %s201
      %p203 = scmp.eq.s32.totalorder %s20, 0
      %p204 = por %p202, %p203
      %p205 = scmp.le.s32.totalorder 1, %s14
      %p206 = scmp.lt.s32.totalorder %s14, 3
      %p207 = pnand %p205, %p206
      %p208 = pneg %p207
      // Predicated region
      $region9: #{tpu_custom_call.1} parent=5 // pred_check
        _
      $region10: #{tpu_custom_call.1} parent=5 // pred_check_branch
        %210 = sbr.rel (%p207) target = $region12
      $region11: #{tpu_custom_call.1} parent=5 // pred_region
        %s211 = ssub.s32 %s14, 1
        // Predicated region
        $region13: #{tpu_custom_call.1} parent=11 // pred_check
          %p212 = pneg %p35
        $region14: #{tpu_custom_call.1} parent=11 // pred_check_branch
          %214 = sbr.rel (%p212) target = $region16
        $region15: #{tpu_custom_call.1} parent=11 // pred_region
          %s216 = ssub.s32 16, 16
          %217 = vsyncadd [#allocation3], %s216
          %s219 = sshll.u32 %s0, 4
          %s220 = int_to_ptr.vmem [resolvable:$true] %s219
          %222 = dma.vmem_to_smem %s220, 16, [#allocation2], [#allocation3]
        $region16: #{tpu_custom_call.1} parent=11 // pred_fallthru
          _
        // Predicated region
        $region17: #{tpu_custom_call.1} parent=11 // pred_check
          %p223 = pneg %p108
        $region18: #{tpu_custom_call.1} parent=11 // pred_check_branch
          %225 = sbr.rel (%p223) target = $region20
        $region19: #{tpu_custom_call.1} parent=11 // pred_region
          _
        $region20: #{tpu_custom_call.1} parent=11 // pred_fallthru
          _
        // Predicated region
        $region21: #{tpu_custom_call.1} parent=11 // pred_check
          %p226 = pneg %p129
        $region22: #{tpu_custom_call.1} parent=11 // pred_check_branch
          %228 = sbr.rel (%p226) target = $region24
        $region23: #{tpu_custom_call.1} parent=11 // pred_region
          _
        $region24: #{tpu_custom_call.1} parent=11 // pred_fallthru
          _
        // Predicated region
        $region25: #{tpu_custom_call.1} parent=11 // pred_check
          %p229 = pneg %p150
        $region26: #{tpu_custom_call.1} parent=11 // pred_check_branch
          %231 = sbr.rel (%p229) target = $region28
        $region27: #{tpu_custom_call.1} parent=11 // pred_region
          _
        $region28: #{tpu_custom_call.1} parent=11 // pred_fallthru
          _
        // Predicated region
        $region29: #{tpu_custom_call.1} parent=11 // pred_check
          %p232 = pneg %p171
        $region30: #{tpu_custom_call.1} parent=11 // pred_check_branch
          %234 = sbr.rel (%p232) target = $region32
        $region31: #{tpu_custom_call.1} parent=11 // pred_region
          _
        $region32: #{tpu_custom_call.1} parent=11 // pred_fallthru
          _
      $region12: #{tpu_custom_call.1} parent=5 // pred_fallthru
        _
      %p235 = scmp.lt.s32.totalorder %s14, 2
      // Predicated region
      $region33: #{tpu_custom_call.1} parent=5 // pred_check
        %p236 = pneg %p235
      $region34: #{tpu_custom_call.1} parent=5 // pred_check_branch
        %238 = sbr.rel (%p236) target = $region36
      $region35: #{tpu_custom_call.1} parent=5 // pred_region
        // Predicated region
        $region37: #{tpu_custom_call.1} parent=35 // pred_check
          %p239 = pneg %p55
        $region38: #{tpu_custom_call.1} parent=35 // pred_check_branch
          %241 = sbr.rel (%p239) target = $region40
        $region39: #{tpu_custom_call.1} parent=35 // pred_region
          %s242 = smul.u32 2, %s14
          %p243 = scmp.lt.s32.totalorder %s242, 3
          %s244 = scalar_select %p243, %s242, 3
          %s245 = smul.addr %s244, 4
          %s246 = scalar_lea.vmem %s1, %s245
          %s247 = smul.u32 2, %s14
        $region40: #{tpu_custom_call.1} parent=35 // pred_fallthru
          _
        // Predicated region
        $region41: #{tpu_custom_call.1} parent=35 // pred_check
          %p248 = pneg %p81
        $region42: #{tpu_custom_call.1} parent=35 // pred_check_branch
          %250 = sbr.rel (%p248) target = $region44
        $region43: #{tpu_custom_call.1} parent=35 // pred_region
          %s251 = smul.u32 2, %s14
          %p252 = scmp.lt.s32.totalorder %s251, 3
          %s253 = scalar_select %p252, %s251, 3
          %s254 = smul.addr %s253, 8
          %s255 = scalar_lea.vmem %s2, %s254
          %s256 = smul.u32 2, %s14
        $region44: #{tpu_custom_call.1} parent=35 // pred_fallthru
          _
      $region36: #{tpu_custom_call.1} parent=5 // pred_fallthru
        _
      %p257 = scmp.le.s32.totalorder 1, %s14
      %p258 = scmp.lt.s32.totalorder %s14, 3
      %p259 = pnand %p257, %p258
      %p260 = pneg %p259
      // Predicated region
      $region45: #{tpu_custom_call.1} parent=5 // pred_check
        _
      $region46: #{tpu_custom_call.1} parent=5 // pred_check_branch
        %262 = sbr.rel (%p259) target = $region48
      $region47: #{tpu_custom_call.1} parent=5 // pred_region
        %s263 = ssub.s32 %s14, 1
        // Predicated region
        $region49: #{tpu_custom_call.1} parent=47 // pred_check
          %p264 = pneg %p35
        $region50: #{tpu_custom_call.1} parent=47 // pred_check_branch
          %266 = sbr.rel (%p264) target = $region52
        $region51: #{tpu_custom_call.1} parent=47 // pred_region
          %267 = dma.done [#allocation3], 16
        $region52: #{tpu_custom_call.1} parent=47 // pred_fallthru
          _
        %268 = sfence
        %p269 = pneg %p35
        %p270 = pneg %p32
        %s271 = smul.u32 2, %s19
        %p272 = scmp.lt.s32.totalorder %s271, 3
        %s273 = scalar_select %p272, %s271, 3
        %s274 = smul.addr %s273, 4
        %s275 = scalar_lea.vmem %s1, %s274
        %p276 = pneg %p61
        %p277 = pneg %p58
        %s278 = smul.u32 2, %s19
        %p279 = scmp.lt.s32.totalorder %s278, 3
        %s280 = scalar_select %p279, %s278, 3
        %s281 = smul.addr %s280, 8
        %s282 = scalar_lea.vmem %s2, %s281
        %p283 = pneg %p87
        %p284 = pneg %p84
        %p285 = pneg %p108
        %p286 = pneg %p105
        %p287 = pneg %p129
        %p288 = pneg %p126
        %p289 = pneg %p150
        %p290 = pneg %p147
        %p291 = pneg %p171
        %p292 = pneg %p168
        %p293 = pneg %p197
        %p294 = pneg %p194
        %s295 = smul.u32 2, %s19
        %p296 = scmp.lt.s32.totalorder %s295, 3
        %s297 = scalar_select %p296, %s295, 3
        %s298 = smul.addr %s297, 8
        %s299 = scalar_lea.vmem %s7, %s298
        %s300 = smul.u32 2, %s19
        %p301 = scmp.lt.s32.totalorder %s300, 3
        %s302 = scalar_select %p301, %s300, 3
        %s303 = smul.addr %s302, 4
        %s304 = scalar_lea.vmem %s1, %s303
        %s305 = smul.u32 2, %s19
        %s306 = smul.u32 2, %s19
        %p307 = scmp.lt.s32.totalorder %s306, 3
        %s308 = scalar_select %p307, %s306, 3
        %s309 = smul.addr %s308, 8
        %s310 = scalar_lea.vmem %s2, %s309
        %s311 = smul.u32 2, %s19
        %s312 = smul.u32 2, %s19
        %p313 = scmp.lt.s32.totalorder %s312, 3
        %s314 = scalar_select %p313, %s312, 3
        %s315 = smul.addr %s314, 8
        %s316 = scalar_lea.vmem %s7, %s315
        %s317 = smul.u32 2, %s19
        %s319 = sld [smem:[#allocation2]]
        %s320 = sld [smem:[#allocation2 + $0x1]]
        %v321 = vld [vmem:[%s304] sm:$0xf]
        %v322 = vld [vmem:[%s304 + $0x4] sm:$0xf]
        %v323 = vunpack.c.l.bf16 %v321
        %v324 = vunpack.c.l.bf16 %v322
        %vm325 = vcmask 261120
        %v326 = vsel %vm325, %v323, 0.0
        %327 = vadd.xlane.f32.xlu0 %v326
        %v328 = vpop.xlane.xlu0 %327
        %v329 = vsel %vm325, %v324, 0.0
        %330 = vadd.xlane.f32.xlu0 %v329
        %v331 = vpop.xlane.xlu0 %330
        %v332 = vrcp.pop 32.0
        %v333 = vmul.f32 %v328, %v332
        %v334 = vmul.f32 %v331, %v332
        %v335 = vsub.f32 %v323, %v333
        %v336 = vsub.f32 %v324, %v334
        %v337 = vmul.f32 %v335, %v335
        %v338 = vmul.f32 %v336, %v336
        %v339 = vsel %vm325, %v337, 0.0
        %340 = vadd.xlane.f32.xlu0 %v339
        %v341 = vpop.xlane.xlu0 %340
        %v342 = vsel %vm325, %v338, 0.0
        %343 = vadd.xlane.f32.xlu0 %v342
        %v344 = vpop.xlane.xlu0 %343
        %v345 = vmul.f32 %v341, %v332
        %v346 = vmul.f32 %v344, %v332
        %v347 = vadd.f32 %v345, 1e-05
        %v348 = vadd.f32 %v346, 1e-05
        %v349 = vrsqrt.pop %v347
        %v350 = vrsqrt.pop %v348
        %v351 = vmul.f32 %v335, %v349
        %v352 = vmul.f32 %v336, %v350
        %v353 = vpack.c.bf16 %v352, %v351
        %v354 = vld [vmem:[%s3] sm:$0xf]
        %v355 = vld [vmem:[%s3 + $0x4] sm:$0xf]
        %v356 = vld [vmem:[%s3 + $0x8] sm:$0xf]
        %v357 = vld [vmem:[%s3 + $0xc] sm:$0xf]
        %v358 = vld [vmem:[%s4] sm:$0x1]
        %v360 = vlaneseq
        %v361 = vshrl.u32 %v360, 7
        %v362 = vsub.s32 0, %v361
        %v363 = vrot.slane %v358, %v362
        %v369 = vunpack.c.l.b16 %v354
        %v370 = vunpack.c.l.b16 %v355
        %v371 = vunpack.c.l.b16 %v356
        %v372 = vunpack.c.l.b16 %v357
        %v373 = vpack.c.b16 %v370, %v369
        %v374 = vpack.c.b16 %v372, %v371
        %v378 = vsel %vm325, %v353, 0
        %380 = vmatprep.subr.bf16.mxu0 0
        %381 = vmatpush1.bf16.msra.mxu0 %v373
        %382 = vmatprep.subr.bf16.mxu0 0
        %383 = vmatpush1.bf16.msra.mxu0 %v374
        %384 = vmatprep.subr.bf16.mxu0 0
        %385 = vmatpush1.bf16.msra.mxu0 0
        %386 = vmatprep.subr.bf16.mxu0 0
        %387 = vmatpush1.bf16.msra.mxu0 0
        %388 = vmatprep.subr.bf16.mxu0 0
        %389 = vmatpush1.bf16.msra.mxu0 0
        %390 = vmatprep.subr.bf16.mxu0 0
        %391 = vmatpush1.bf16.msra.mxu0 0
        %392 = vmatprep.subr.bf16.mxu0 0
        %393 = vmatpush1.bf16.msra.mxu0 0
        %394 = vmatprep.subr.bf16.mxu0 0
        %395 = vmatpush1.bf16.msra.mxu0 0
        %396 = vmatprep.subr.bf16.mxu0 0
        %397 = vmatpush1.bf16.msra.mxu0 0
        %398 = vmatprep.subr.bf16.mxu0 0
        %399 = vmatpush1.bf16.msra.mxu0 0
        %400 = vmatprep.subr.bf16.mxu0 0
        %401 = vmatpush1.bf16.msra.mxu0 0
        %402 = vmatprep.subr.bf16.mxu0 0
        %403 = vmatpush1.bf16.msra.mxu0 0
        %404 = vmatprep.subr.bf16.mxu0 0
        %405 = vmatpush1.bf16.msra.mxu0 0
        %406 = vmatprep.subr.bf16.mxu0 0
        %407 = vmatpush1.bf16.msra.mxu0 0
        %408 = vmatprep.subr.bf16.mxu0 0
        %409 = vmatpush1.bf16.msra.mxu0 0
        %410 = vmatprep.subr.bf16.mxu0 0
        %411 = vmatpush1.bf16.msra.mxu0 0
        %412 = vmatprep.mubr.bf16.mxu0 0
        %413 = vmatmul.mubr.bf16.gmra.mrb[0].mxu0 %v378
        %v414 = vpop.f32.mrb[0].mxu0
        %v415 = vadd.f32 %v363, %v414
        %v416 = vpop.f32.mrb[0].mxu0
        %v417 = vpop.f32.mrb[0].mxu0
        %v418 = vadd.f32 %v363, %v417
        %v419 = vpop.f32.mrb[0].mxu0
        %420 = vdwg.mxu0
        %v421 = vsel %vm325, %v415, 0.0
        %422 = vadd.xlane.f32.xlu0 %v421
        %v423 = vpop.xlane.xlu0 %422
        %v424 = vsel %vm325, %v418, 0.0
        %425 = vadd.xlane.f32.xlu0 %v424
        %v426 = vpop.xlane.xlu0 %425
        %v427 = vmul.f32 %v423, %v332
        %v428 = vmul.f32 %v426, %v332
        %v429 = vsub.f32 %v415, %v427
        %v430 = vsub.f32 %v418, %v428
        %v431 = vmul.f32 %v429, %v429
        %v432 = vmul.f32 %v430, %v430
        %v433 = vsel %vm325, %v431, 0.0
        %434 = vadd.xlane.f32.xlu0 %v433
        %v435 = vpop.xlane.xlu0 %434
        %v436 = vsel %vm325, %v432, 0.0
        %437 = vadd.xlane.f32.xlu0 %v436
        %v438 = vpop.xlane.xlu0 %437
        %v439 = vmul.f32 %v435, %v332
        %v440 = vmul.f32 %v438, %v332
        %v441 = vadd.f32 %v439, 1e-05
        %v442 = vadd.f32 %v440, 1e-05
        %v443 = vrsqrt.pop %v441
        %v444 = vrsqrt.pop %v442
        %v445 = vmul.f32 %v429, %v443
        %v446 = vmul.f32 %v430, %v444
        %v447 = vld [vmem:[%s5] sm:$0xff]
        %v448 = vld [vmem:[%s5 + $0x8] sm:$0xff]
        %v449 = vld [vmem:[%s5 + $0x10] sm:$0xff]
        %v450 = vld [vmem:[%s5 + $0x18] sm:$0xff]
        %v451 = vld [vmem:[%s6] sm:$0x1]
        %v453 = vlaneseq
        %v454 = vshrl.u32 %v453, 7
        %v455 = vsub.s32 0, %v454
        %v456 = vrot.slane %v451, %v455
        %v459 = vsel %vm325, %v445, 0
        %v462 = vsel %vm325, %v446, 0
        %464 = vmatprep.subr.mxu0 0.0
        %465 = vmatpush1.msra.mxu0 %v447
        %466 = vmatprep.subr.mxu0 0.0
        %467 = vmatpush1.msra.mxu0 %v448
        %468 = vmatprep.subr.mxu0 0.0
        %469 = vmatpush1.msra.mxu0 %v449
        %470 = vmatprep.subr.mxu0 0.0
        %471 = vmatpush1.msra.mxu0 %v450
        %472 = vmatprep.subr.mxu0 0.0
        %473 = vmatpush1.msra.mxu0 0.0
        %474 = vmatprep.subr.mxu0 0.0
        %475 = vmatpush1.msra.mxu0 0.0
        %476 = vmatprep.subr.mxu0 0.0
        %477 = vmatpush1.msra.mxu0 0.0
        %478 = vmatprep.subr.mxu0 0.0
        %479 = vmatpush1.msra.mxu0 0.0
        %480 = vmatprep.subr.mxu0 0.0
        %481 = vmatpush1.msra.mxu0 0.0
        %482 = vmatprep.subr.mxu0 0.0
        %483 = vmatpush1.msra.mxu0 0.0
        %484 = vmatprep.subr.mxu0 0.0
        %485 = vmatpush1.msra.mxu0 0.0
        %486 = vmatprep.subr.mxu0 0.0
        %487 = vmatpush1.msra.mxu0 0.0
        %488 = vmatprep.subr.mxu0 0.0
        %489 = vmatpush1.msra.mxu0 0.0
        %490 = vmatprep.subr.mxu0 0.0
        %491 = vmatpush1.msra.mxu0 0.0
        %492 = vmatprep.subr.mxu0 0.0
        %493 = vmatpush1.msra.mxu0 0.0
        %494 = vmatprep.subr.mxu0 0.0
        %495 = vmatpush1.msra.mxu0 0.0
        %496 = vmatprep.subr.mxu0 0.0
        %497 = vmatpush1.msra.mxu0 0.0
        %498 = vmatprep.subr.mxu0 0.0
        %499 = vmatpush1.msra.mxu0 0.0
        %500 = vmatprep.subr.mxu0 0.0
        %501 = vmatpush1.msra.mxu0 0.0
        %502 = vmatprep.subr.mxu0 0.0
        %503 = vmatpush1.msra.mxu0 0.0
        %504 = vmatprep.subr.mxu0 0.0
        %505 = vmatpush1.msra.mxu0 0.0
        %506 = vmatprep.subr.mxu0 0.0
        %507 = vmatpush1.msra.mxu0 0.0
        %508 = vmatprep.subr.mxu0 0.0
        %509 = vmatpush1.msra.mxu0 0.0
        %510 = vmatprep.subr.mxu0 0.0
        %511 = vmatpush1.msra.mxu0 0.0
        %512 = vmatprep.subr.mxu0 0.0
        %513 = vmatpush1.msra.mxu0 0.0
        %514 = vmatprep.subr.mxu0 0.0
        %515 = vmatpush1.msra.mxu0 0.0
        %516 = vmatprep.subr.mxu0 0.0
        %517 = vmatpush1.msra.mxu0 0.0
        %518 = vmatprep.subr.mxu0 0.0
        %519 = vmatpush1.msra.mxu0 0.0
        %520 = vmatprep.subr.mxu0 0.0
        %521 = vmatpush1.msra.mxu0 0.0
        %522 = vmatprep.subr.mxu0 0.0
        %523 = vmatpush1.msra.mxu0 0.0
        %524 = vmatprep.subr.mxu0 0.0
        %525 = vmatpush1.msra.mxu0 0.0
        %526 = vmatprep.subr.mxu0 0.0
        %527 = vmatpush1.msra.mxu0 0.0
        %528 = vmatprep.mubr.f32.mxu0 0.0
        %529 = vmatmul.mubr.f32.gmra.mrb[0].mxu0 %v459
        %v530 = vpop.f32.mrb[0].mxu0
        %v531 = vadd.f32 %v456, %v530
        %v532 = vpop.f32.mrb[0].mxu0
        %533 = vmatprep.mubr.f32.mxu0 0.0
        %534 = vmatmul.mubr.f32.gmra.mrb[0].mxu0 %v462
        %v535 = vpop.f32.mrb[0].mxu0
        %v536 = vadd.f32 %v456, %v535
        %v537 = vpop.f32.mrb[0].mxu0
        %538 = vdwg.mxu0
        %vm539 = vcmask 64512
        %v540 = vsel %vm539, %v531, -inf
        %541 = vmax.xlane.f32.xlu0 %v540
        %v542 = vpop.xlane.xlu0 %541
        %v543 = vsel %vm539, %v536, -inf
        %544 = vmax.xlane.f32.xlu0 %v543
        %v545 = vpop.xlane.xlu0 %544
        %v546 = vsub.f32 %v531, %v542
        %v547 = vsub.f32 %v536, %v545
        %v548 = vmul.f32 %v546, 1.442695
        %v549 = vpow.pop %v548
        %v550 = vmul.f32 %v547, 1.442695
        %v551 = vpow.pop %v550
        %v552 = vld [vmem:[%s310] sm:$0xff]
        %v553 = vld [vmem:[%s310 + $0x8] sm:$0xff]
        %v554 = vmul.f32 %v549, %v552
        %v555 = vmul.f32 %v551, %v553
        %v556 = vsel %vm539, %v554, 0.0
        %557 = vadd.xlane.f32.xlu0 %v556
        %v558 = vpop.xlane.xlu0 %557
        %v559 = vsel %vm539, %v555, 0.0
        %560 = vadd.xlane.f32.xlu0 %v559
        %v561 = vpop.xlane.xlu0 %560
        %v562 = vsel %vm539, %v549, 0.0
        %563 = vadd.xlane.f32.xlu0 %v562
        %v564 = vpop.xlane.xlu0 %563
        %v565 = vsel %vm539, %v551, 0.0
        %566 = vadd.xlane.f32.xlu0 %v565
        %v567 = vpop.xlane.xlu0 %566
        %v568 = vrcp.pop %v564
        %v569 = vmul.f32 %v558, %v568
        %v570 = vrcp.pop %v567
        %v571 = vmul.f32 %v561, %v570
        %v572 = vmax.f32 %v569, 0.0001
        %v573 = vmax.f32 %v571, 0.0001
        %v574 = vmin.f32 %v572, 0.9999
        %v575 = vmin.f32 %v573, 0.9999
        %v576 = vlog2.pop %v574
        %v577 = vmul.f32 %v576, 0.6931472
        %v578 = vlog2.pop %v575
        %v579 = vmul.f32 %v578, 0.6931472
        %v580 = vsub.f32 1.0, %v574
        %v581 = vsub.f32 1.0, %v575
        %v582 = vlog2.pop %v580
        %v583 = vmul.f32 %v582, 0.6931472
        %v584 = vlog2.pop %v581
        %v585 = vmul.f32 %v584, 0.6931472
        %v586 = vsub.f32 %v577, %v583
        %v587 = vsub.f32 %v579, %v585
        %v588 = vstv %s319
        %v589 = vmul.f32 %v588, %v586
        %v590 = vmul.f32 %v588, %v587
        %v591 = vstv %s320
        %v592 = vadd.f32 %v589, %v591
        %v593 = vadd.f32 %v590, %v591
        %v594 = vxor.u32 %v592, 2147483648
        %v595 = vxor.u32 %v593, 2147483648
        %v596 = vmul.f32 %v594, 1.442695
        %v597 = vpow.pop %v596
        %v598 = vmul.f32 %v595, 1.442695
        %v599 = vpow.pop %v598
        %v600 = vadd.f32 %v597, 1.0
        %v601 = vadd.f32 %v599, 1.0
        %v602 = vrcp.pop %v600
        %v603 = vmul.f32 1.0, %v602
        %v604 = vrcp.pop %v601
        %v605 = vmul.f32 1.0, %v604
        %vm606 = vcmask 7168
        %607 = vst.msk [vmem:[%s316] sm:$0xff] %vm606, %v603
        %608 = vst.msk [vmem:[%s316 + $0x8] sm:$0xff] %vm606, %v605
        %s609 = smul.u32 2, %s19
        %p610 = scmp.lt.s32.totalorder %s609, 3
        %s611 = scalar_select %p610, %s609, 3
        %s612 = smul.addr %s611, 8
        %s613 = scalar_lea.vmem %s7, %s612
        // Predicated region
        $region53: #{tpu_custom_call.1} parent=47 // pred_check
          %p614 = pneg %p194
        $region54: #{tpu_custom_call.1} parent=47 // pred_check_branch
          %616 = sbr.rel (%p614) target = $region56
        $region55: #{tpu_custom_call.1} parent=47 // pred_region
          %s617 = smul.u32 2, %s19
        $region56: #{tpu_custom_call.1} parent=47 // pred_fallthru
          _
      $region48: #{tpu_custom_call.1} parent=5 // pred_fallthru
        _
      %p618 = scmp.le.s32.totalorder 2, %s14
      // Predicated region
      $region57: #{tpu_custom_call.1} parent=5 // pred_check
        %p619 = pneg %p618
      $region58: #{tpu_custom_call.1} parent=5 // pred_check_branch
        %621 = sbr.rel (%p619) target = $region60
      $region59: #{tpu_custom_call.1} parent=5 // pred_region
        %s622 = ssub.s32 %s14, 2
        // Predicated region
        $region61: #{tpu_custom_call.1} parent=59 // pred_check
          %p623 = pneg %p200
        $region62: #{tpu_custom_call.1} parent=59 // pred_check_branch
          %625 = sbr.rel (%p623) target = $region64
        $region63: #{tpu_custom_call.1} parent=59 // pred_region
          %s626 = smul.u32 2, %s20
          %p627 = scmp.lt.s32.totalorder %s626, 3
          %s628 = scalar_select %p627, %s626, 3
          %s629 = smul.addr %s628, 8
          %s630 = scalar_lea.vmem %s7, %s629
        $region64: #{tpu_custom_call.1} parent=59 // pred_fallthru
          _
      $region60: #{tpu_custom_call.1} parent=5 // pred_fallthru
        _
    $region6: #{tpu_custom_call.1} parent=1 // loop_footer
      %s18 = sadd.s32 1, %s14
    $region7: #{tpu_custom_call.1} parent=1 // loop_footer_branch
      %13 = sbr.rel target = $region3
    $region8: #{tpu_custom_call.1} parent=1 // loop_exit
      _
    %631 = vsyncpa [#allocation3], 1
    %s632 = scalar_lea.sflag [#allocation3], 1
    %633 = vsyncpa %s632, 1

</llo_original>
